<compile_context>
chip_gen: v7x
topology: tpu7x:2x2x1
jax: 0.10.0
libtpu: 0.0.40
codegen_flags: <defaults>
</compile_context>

<pallas_src>
import functools

import jax
import jax.numpy as jnp
from jax.experimental import pallas as pl
from jax.experimental.pallas import tpu as pltpu

_MIB = 1024 * 1024


def _vmem_budget_bytes():
    """Per-generation usable VMEM budget (physical minus compiler headroom)."""
    try:
        cap = int(pltpu.get_tpu_info().vmem_capacity_bytes)
    except Exception:
        cap = 64 * _MIB  # conservative fallback: v7x per-TC physical VMEM
    # 128 MiB parts (v5e/v6e) -> 112 MiB budget; 64 MiB parts (v7x) -> 48 MiB.
    return int(max(cap - 16 * _MIB, (cap * 3) // 4))


def _pick_batch_tile(B):
    """Batch tile for the leading 'parallel' grid axis (v7x megacore).

    Only tiles when the resulting output block still satisfies the (8, 128)
    sublane constraint; otherwise the whole batch goes in one block.
    """
    if B % 16 == 0:
        return B // 2
    if B % 8 == 0 and B // 8 >= 2:
        return 8
    return B


def _pick_seq_tile(S, TB, D, h_itemsize, resident_bytes, budget, n_streams):
    """Largest multiple-of-8 seq tile whose double-buffered hidden tiles fit
    in the VMEM budget next to the resident weights / accumulators."""
    avail = budget - resident_bytes
    per_seq_row = n_streams * 2 * TB * D * h_itemsize  # 2 = double-buffered DMA
    if per_seq_row <= 0 or avail <= 0:
        return S
    ts = int(avail // per_seq_row)
    ts -= ts % 8
    if ts >= S:
        return S  # a single full-extent block is always a legal block shape
    return max(8, ts)


def _make_fused_kernel(inv_s, tb, ts, seq_len, mask_last):
    """Mean-pool both streams (tiled seq reduction, shared f32 accumulator) +
    fused base linear + LoRA epilogue on the last seq step."""

    def kernel(t_ref, k_ref, w_ref, b_ref, a_ref, bb_ref,
               o_t_ref, o_k_ref, acc_ref):
        # t_ref/k_ref: [TB, TS, D]   w_ref: [D, D] (D_in x D_out)
        # b_ref: [1, D]  a_ref: [D, K]  bb_ref: [K, D] (scaling pre-folded)
        # o_*_ref: [TB, D]            acc_ref: [2*TB, D] f32 scratch
        s = pl.program_id(1)

        @pl.when(s == 0)
        def _():
            acc_ref[...] = jnp.zeros_like(acc_ref)

        # Only the current seq tiles are upcast; running sums kept in f32.
        t32 = t_ref[...].astype(jnp.float32)
        k32 = k_ref[...].astype(jnp.float32)
        if mask_last:
            # ceil-div grid: zero out rows past the true sequence length.
            valid = (jax.lax.broadcasted_iota(jnp.int32, (1, ts, 1), 1)
                     + s * ts) < seq_len
            t32 = jnp.where(valid, t32, 0.0)
            k32 = jnp.where(valid, k32, 0.0)
        acc_ref[0:tb, :] += jnp.sum(t32, axis=1)
        acc_ref[tb:2 * tb, :] += jnp.sum(k32, axis=1)

        @pl.when(s == pl.num_programs(1) - 1)
        def _():
            pooled = acc_ref[...] * inv_s          # [2*TB, D] f32 mean pool
            p_in = pooled.astype(w_ref.dtype)      # MXU-native dtype (bf16 ok)
            base = jnp.dot(p_in, w_ref[...],
                           preferred_element_type=jnp.float32)
            low = jnp.dot(p_in, a_ref[...],
                          preferred_element_type=jnp.float32)         # [2TB, K]
            lora = jnp.dot(low.astype(bb_ref.dtype), bb_ref[...],
                           preferred_element_type=jnp.float32)        # [2TB, D]
            out = base + lora + b_ref[...].astype(jnp.float32)
            o_t_ref[...] = out[0:tb, :].astype(o_t_ref.dtype)
            o_k_ref[...] = out[tb:2 * tb, :].astype(o_k_ref.dtype)

    return kernel


def _build_fused_call(B, S, D, K, TB, TS, h_dtype, w_dtype, inv_s, budget,
                      single_buffer_weights):
    ns = pl.cdiv(S, TS)
    mask_last = (S % TS) != 0
    kernel = _make_fused_kernel(inv_s, TB, TS, S, mask_last)

    # Weights / bias stay resident in VMEM for the whole grid (constant
    # index_map); single-buffer them so they don't cost 2x VMEM.
    weight_kwargs = {}
    if single_buffer_weights:
        weight_kwargs = dict(pipeline_mode=pl.Buffered(1))

    def w_spec(shape):
        return pl.BlockSpec(shape, lambda b, s: (0, 0), **weight_kwargs)

    h_itemsize = jnp.dtype(h_dtype).itemsize
    w_itemsize = jnp.dtype(w_dtype).itemsize
    h_bytes = 2 * B * S * D * h_itemsize                    # read each stream once
    w_bytes = (D * D + D * K + K * D) * w_itemsize + D * 4  # weights + f32 bias
    cost = pl.CostEstimate(
        flops=int(2 * B * S * D + 4 * B * D * D + 8 * B * D * K),
        transcendentals=0,
        bytes_accessed=int(h_bytes + w_bytes + 2 * B * D * 4),
    )

    return pl.pallas_call(
        kernel,
        out_shape=(jax.ShapeDtypeStruct((B, D), jnp.float32),
                   jax.ShapeDtypeStruct((B, D), jnp.float32)),
        grid_spec=pltpu.PrefetchScalarGridSpec(
            num_scalar_prefetch=0,
            grid=(B // TB, ns),
            in_specs=[
                # Pipelined (double-buffered) hidden-state tiles, one per stream.
                pl.BlockSpec((TB, TS, D), lambda b, s: (b, s, 0)),
                pl.BlockSpec((TB, TS, D), lambda b, s: (b, s, 0)),
                # Resident weights / bias.
                w_spec((D, D)),
                w_spec((1, D)),
                w_spec((D, K)),
                w_spec((K, D)),
            ],
            out_specs=[pl.BlockSpec((TB, D), lambda b, s: (b, 0)),
                       pl.BlockSpec((TB, D), lambda b, s: (b, 0))],
            scratch_shapes=[pltpu.VMEM((2 * TB, D), jnp.float32)],
        ),
        compiler_params=pltpu.CompilerParams(
            dimension_semantics=("parallel", "arbitrary"),
            vmem_limit_bytes=int(budget),
        ),
        cost_estimate=cost,
    )


def fused_pool_and_lora(text_hidden, keyword_hidden, w, b, lora_a, lora_b,
                        scaling, *, seq_tile=None, batch_tile=None,
                        compute_dtype=None):
    """One pallas_call for both streams: mean pool + lora.Linear.

    text_hidden / keyword_hidden: [B, S, D] hidden states (no host-side stack).
    w: [D_out, D_in], b: [D_out], lora_a: [K, D_in], lora_b: [D_out, K]
    (PyTorch / loralib layout). Returns (text_emb, keyword_emb), each [B, D] f32.
    compute_dtype: e.g. jnp.bfloat16 to halve weight HBM/VMEM (looser accuracy).
    """
    B, S, D = text_hidden.shape
    assert keyword_hidden.shape == (B, S, D)
    K = lora_a.shape[0]

    # Pre-transpose once host-side (no in-kernel .T / XLU relayout) and fold
    # the LoRA `scaling` into B^T so the epilogue has no extra VPU multiply.
    w_t = jnp.transpose(w)                                            # [D_in, D_out]
    a_t = jnp.transpose(lora_a)                                       # [D_in, K]
    bb_t = jnp.transpose(lora_b) * jnp.asarray(scaling, dtype=lora_b.dtype)
    b2d = b.reshape(1, D).astype(jnp.float32)
    if compute_dtype is not None:
        w_t = w_t.astype(compute_dtype)
        a_t = a_t.astype(compute_dtype)
        bb_t = bb_t.astype(compute_dtype)

    budget = _vmem_budget_bytes()
    TB = batch_tile or _pick_batch_tile(B)
    assert B % TB == 0, "batch tile must divide B"

    w_itemsize = jnp.dtype(w_t.dtype).itemsize
    h_itemsize = jnp.dtype(text_hidden.dtype).itemsize
    resident = ((D * D + D * K + K * D) * w_itemsize + D * 4  # single-buffered weights
                + 2 * TB * D * 4                              # f32 accumulator
                + 2 * 2 * TB * D * 4)                         # double-buffered outputs
    TS = seq_tile or _pick_seq_tile(S, TB, D, h_itemsize, resident, budget,
                                    n_streams=2)

    args = (text_hidden, keyword_hidden, w_t, b2d, a_t, bb_t)
    build = functools.partial(_build_fused_call, B, S, D, K, TB, TS,
                              text_hidden.dtype, w_t.dtype, 1.0 / S, budget)
    try:
        return build(single_buffer_weights=True)(*args)
    except Exception:
        # pl.Buffered(1) not supported by this jax build -> default buffering.
        return build(single_buffer_weights=False)(*args)


def mean_pool(hidden, *, seq_tile=None, batch_tile=None):
    """Tiled mean-pool over seq (forward(keyword_tokens=None) path, no LoRA)."""
    B, S, D = hidden.shape
    budget = _vmem_budget_bytes()
    TB = batch_tile or _pick_batch_tile(B)
    assert B % TB == 0
    h_itemsize = jnp.dtype(hidden.dtype).itemsize
    resident = TB * D * 4 + 2 * TB * D * 4
    TS = seq_tile or _pick_seq_tile(S, TB, D, h_itemsize, resident, budget,
                                    n_streams=1)
    ns = pl.cdiv(S, TS)
    mask_last = (S % TS) != 0
    inv_s = 1.0 / S

    def kernel(h_ref, o_ref, acc_ref):
        s = pl.program_id(1)

        @pl.when(s == 0)
        def _():
            acc_ref[...] = jnp.zeros_like(acc_ref)

        h32 = h_ref[...].astype(jnp.float32)
        if mask_last:
            valid = (jax.lax.broadcasted_iota(jnp.int32, (1, TS, 1), 1)
                     + s * TS) < S
            h32 = jnp.where(valid, h32, 0.0)
        acc_ref[...] += jnp.sum(h32, axis=1)

        @pl.when(s == pl.num_programs(1) - 1)
        def _():
            o_ref[...] = (acc_ref[...] * inv_s).astype(o_ref.dtype)

    return pl.pallas_call(
        kernel,
        out_shape=jax.ShapeDtypeStruct((B, D), jnp.float32),
        grid_spec=pltpu.PrefetchScalarGridSpec(
            num_scalar_prefetch=0,
            grid=(B // TB, ns),
            in_specs=[pl.BlockSpec((TB, TS, D), lambda bb, ss: (bb, ss, 0))],
            out_specs=pl.BlockSpec((TB, D), lambda bb, ss: (bb, 0)),
            scratch_shapes=[pltpu.VMEM((TB, D), jnp.float32)],
        ),
        compiler_params=pltpu.CompilerParams(
            dimension_semantics=("parallel", "arbitrary"),
            vmem_limit_bytes=int(budget),
        ),
    )(hidden)


def contrastive_forward(text_hidden, keyword_hidden, params, *, seq_tile=None,
                        compute_dtype=None):
    """Mirrors ContrastiveModel.forward with use_lora=True.

    text_hidden / keyword_hidden: LLM hidden_states[self.lora_layer], [B, S, D].
    Returns (text_embedding, keyword_embedding), each [B, D].
    """
    w, b, lora_a, lora_b, scaling = params
    if keyword_hidden is None:
        # forward(keyword_tokens=None) returns the raw pooled embedding.
        return mean_pool(text_hidden, seq_tile=seq_tile), None
    return fused_pool_and_lora(text_hidden, keyword_hidden, w, b, lora_a,
                               lora_b, scaling, seq_tile=seq_tile,
                               compute_dtype=compute_dtype)


def reference_forward(text_hidden, keyword_hidden, params):
    """Plain-JAX reference for correctness check."""
    w, b, lora_a, lora_b, scaling = params

    def one(h):
        pooled = jnp.mean(h.astype(jnp.float32), axis=1)
        base = pooled @ w.T + b
        lora = (pooled @ lora_a.T) @ lora_b.T * scaling
        return base + lora

    if keyword_hidden is None:
        return jnp.mean(text_hidden.astype(jnp.float32), axis=1), None
    return one(text_hidden), one(keyword_hidden)


if __name__ == "__main__":
    # Small shapes implied by the forward: batch=2, seq=16 (tiled by 8),
    # hidden=32, LoRA rank K=4.
    B, S, D, K = 2, 16, 32, 4
    TS = 8  # exercises the tiled seq reduction (2 grid steps along seq)

    key = jax.random.PRNGKey(0)
    k1, k2, k3, k4, k5, k6 = jax.random.split(key, 6)

    # Simulated LLM hidden states (stand-in for outputs.hidden_states[-1]).
    text_hidden = jax.random.normal(k1, (B, S, D), dtype=jnp.float32)
    keyword_hidden = jax.random.normal(k2, (B, S, D), dtype=jnp.float32)

    # lora.Linear(d_model, d_model, r=K) parameters.
    w = jax.random.normal(k3, (D, D), dtype=jnp.float32) * 0.05
    b_ = jax.random.normal(k4, (D,), dtype=jnp.float32) * 0.01
    lora_a = jax.random.normal(k5, (K, D), dtype=jnp.float32) * 0.05
    lora_b = jax.random.normal(k6, (D, K), dtype=jnp.float32) * 0.05
    scaling = 1.0 / K  # lora_alpha(=1) / r
    params = (w, b_, lora_a, lora_b, scaling)

    # 1) Full path: text + keyword as two inputs of ONE pallas_call (no stack).
    text_emb, keyword_emb = contrastive_forward(
        text_hidden, keyword_hidden, params, seq_tile=TS)
    jax.block_until_ready(text_emb)
    jax.block_until_ready(keyword_emb)
    ref_text, ref_kw = reference_forward(text_hidden, keyword_hidden, params)
    assert text_emb.shape == (B, D) and keyword_emb.shape == (B, D)
    assert jnp.allclose(text_emb, ref_text, atol=1e-4, rtol=1e-4)
    assert jnp.allclose(keyword_emb, ref_kw, atol=1e-4, rtol=1e-4)

    # 2) bf16 weight path (halved weight HBM/VMEM, MXU-native) — bf16 rounding
    #    of the pooled activations/weights means a looser tolerance vs f32 ref.
    t16, k16 = contrastive_forward(text_hidden, keyword_hidden, params,
                                   seq_tile=TS, compute_dtype=jnp.bfloat16)
    jax.block_until_ready(t16)
    assert jnp.allclose(t16, ref_text, atol=3e-2, rtol=3e-2)
    assert jnp.allclose(k16, ref_kw, atol=3e-2, rtol=3e-2)

    # 3) Ragged seq length (S=12 not a multiple of the tile): ceil-div grid
    #    with a masked last tile instead of a monolithic block.
    tr = text_hidden[:, :12, :]
    kr = keyword_hidden[:, :12, :]
    tre, kre = contrastive_forward(tr, kr, params, seq_tile=TS)
    jax.block_until_ready(tre)
    ref_tr, ref_kr = reference_forward(tr, kr, params)
    assert jnp.allclose(tre, ref_tr, atol=1e-4, rtol=1e-4)
    assert jnp.allclose(kre, ref_kr, atol=1e-4, rtol=1e-4)

    # 4) keyword_tokens=None path: raw pooled embedding, no LoRA.
    pooled_only, none_emb = contrastive_forward(text_hidden, None, params,
                                                seq_tile=TS)
    jax.block_until_ready(pooled_only)
    ref_pooled, _ = reference_forward(text_hidden, None, params)
    assert none_emb is None
    assert jnp.allclose(pooled_only, ref_pooled, atol=1e-4, rtol=1e-4)

    print("KERNEL_OK")
</pallas_src>

<mosaic_0001>
module attributes {stable_mosaic.version = 11 : i64} {
  func.func @kernel(%arg0: i32, %arg1: i32, %arg2: memref<2x8x32xf32, #tpu.memory_space<vmem>>, %arg3: memref<2x8x32xf32, #tpu.memory_space<vmem>>, %arg4: memref<32x32xf32, #tpu.memory_space<vmem>>, %arg5: memref<1x32xf32, #tpu.memory_space<vmem>>, %arg6: memref<32x4xf32, #tpu.memory_space<vmem>>, %arg7: memref<4x32xf32, #tpu.memory_space<vmem>>, %arg8: memref<2x32xf32, #tpu.memory_space<vmem>>, %arg9: memref<2x32xf32, #tpu.memory_space<vmem>>, %arg10: memref<4x32xf32, #tpu.memory_space<vmem>>) attributes {dimension_semantics = [#tpu.dimension_semantics<parallel>, #tpu.dimension_semantics<arbitrary>], iteration_bounds = array<i64: 1, 2>, scalar_prefetch = 0 : i64, scratch_operands = 1 : i64, tpu.core_type = #tpu.core_type<tc>, window_params = [{transform_indices = @transform_0, window_bounds = array<i64: 2, 8, 32>}, {transform_indices = @transform_1, window_bounds = array<i64: 2, 8, 32>}, {pipeline_mode = #tpu.pipeline_mode<synchronous>, transform_indices = @transform_2, window_bounds = array<i64: 32, 32>}, {pipeline_mode = #tpu.pipeline_mode<synchronous>, transform_indices = @transform_3, window_bounds = array<i64: 1, 32>}, {pipeline_mode = #tpu.pipeline_mode<synchronous>, transform_indices = @transform_4, window_bounds = array<i64: 32, 4>}, {pipeline_mode = #tpu.pipeline_mode<synchronous>, transform_indices = @transform_5, window_bounds = array<i64: 4, 32>}, {transform_indices = @transform_6, window_bounds = array<i64: 2, 32>}, {transform_indices = @transform_7, window_bounds = array<i64: 2, 32>}]} {
    %c0_i32 = arith.constant 0 : i32
    %0 = arith.cmpi eq, %arg1, %c0_i32 : i32
    %1 = arith.extui %0 : i1 to i32
    %c0_i32_0 = arith.constant 0 : i32
    %2 = arith.cmpi ne, %1, %c0_i32_0 : i32
    scf.if %2 {
      %cst_15 = arith.constant 0.000000e+00 : f32
      %16 = vector.broadcast %cst_15 : f32 to vector<4x32xf32>
      %c0_16 = arith.constant 0 : index
      %c0_17 = arith.constant 0 : index
      %17 = vector.load %arg10[%c0_16, %c0_17] : memref<4x32xf32, #tpu.memory_space<vmem>>, vector<4x32xf32>
      tpu.vector_store %arg10[%c0_16, %c0_17], %16 {strides = array<i32>} : memref<4x32xf32, #tpu.memory_space<vmem>>, vector<4x32xf32>,
    } else {
    }
    %c0 = arith.constant 0 : index
    %c0_1 = arith.constant 0 : index
    %c0_2 = arith.constant 0 : index
    %3 = vector.load %arg2[%c0, %c0_1, %c0_2] : memref<2x8x32xf32, #tpu.memory_space<vmem>>, vector<2x8x32xf32>
    %c0_3 = arith.constant 0 : index
    %c0_4 = arith.constant 0 : index
    %c0_5 = arith.constant 0 : index
    %4 = vector.load %arg3[%c0_3, %c0_4, %c0_5] : memref<2x8x32xf32, #tpu.memory_space<vmem>>, vector<2x8x32xf32>
    %c0_6 = arith.constant 0 : index
    %c0_7 = arith.constant 0 : index
    %5 = vector.load %arg10[%c0_6, %c0_7] : memref<4x32xf32, #tpu.memory_space<vmem>>, vector<2x32xf32>
    %cst = arith.constant dense<0.000000e+00> : vector<2x32xf32>
    %6 = vector.multi_reduction <add>, %3, %cst [1] : vector<2x8x32xf32> to vector<2x32xf32>
    %7 = arith.addf %5, %6 : vector<2x32xf32>
    %c0_8 = arith.constant 0 : index
    %c0_9 = arith.constant 0 : index
    %8 = vector.load %arg10[%c0_8, %c0_9] : memref<4x32xf32, #tpu.memory_space<vmem>>, vector<2x32xf32>
    tpu.vector_store %arg10[%c0_8, %c0_9], %7 {strides = array<i32>} : memref<4x32xf32, #tpu.memory_space<vmem>>, vector<2x32xf32>,
    %c2 = arith.constant 2 : index
    %c0_10 = arith.constant 0 : index
    %9 = vector.load %arg10[%c2, %c0_10] : memref<4x32xf32, #tpu.memory_space<vmem>>, vector<2x32xf32>
    %cst_11 = arith.constant dense<0.000000e+00> : vector<2x32xf32>
    %10 = vector.multi_reduction <add>, %4, %cst_11 [1] : vector<2x8x32xf32> to vector<2x32xf32>
    %11 = arith.addf %9, %10 : vector<2x32xf32>
    %c2_12 = arith.constant 2 : index
    %c0_13 = arith.constant 0 : index
    %12 = vector.load %arg10[%c2_12, %c0_13] : memref<4x32xf32, #tpu.memory_space<vmem>>, vector<2x32xf32>
    tpu.vector_store %arg10[%c2_12, %c0_13], %11 {strides = array<i32>} : memref<4x32xf32, #tpu.memory_space<vmem>>, vector<2x32xf32>,
    %c1_i32 = arith.constant 1 : i32
    %13 = arith.cmpi eq, %arg1, %c1_i32 : i32
    %14 = arith.extui %13 : i1 to i32
    %c0_i32_14 = arith.constant 0 : i32
    %15 = arith.cmpi ne, %14, %c0_i32_14 : i32
    scf.if %15 {
      %c0_15 = arith.constant 0 : index
      %c0_16 = arith.constant 0 : index
      %16 = vector.load %arg10[%c0_15, %c0_16] : memref<4x32xf32, #tpu.memory_space<vmem>>, vector<4x32xf32>
      %cst_17 = arith.constant 6.250000e-02 : f32
      %17 = vector.broadcast %cst_17 : f32 to vector<4x32xf32>
      %18 = arith.mulf %16, %17 : vector<4x32xf32>
      %c0_18 = arith.constant 0 : index
      %c0_19 = arith.constant 0 : index
      %19 = vector.load %arg4[%c0_18, %c0_19] : memref<32x32xf32, #tpu.memory_space<vmem>>, vector<32x32xf32>
      %cst_20 = arith.constant dense<0.000000e+00> : vector<4x32xf32>
      %20 = tpu.matmul %18, %19, %cst_20 {dimension_numbers = #tpu.dot_dimension_numbers<[1], [0], [0], [1], [0, 0, 1, 1], [], []>} : vector<4x32xf32>, vector<32x32xf32>, vector<4x32xf32> -> vector<4x32xf32>
      %c0_21 = arith.constant 0 : index
      %c0_22 = arith.constant 0 : index
      %21 = vector.load %arg6[%c0_21, %c0_22] : memref<32x4xf32, #tpu.memory_space<vmem>>, vector<32x4xf32>
      %cst_23 = arith.constant dense<0.000000e+00> : vector<4x4xf32>
      %22 = tpu.matmul %18, %21, %cst_23 {dimension_numbers = #tpu.dot_dimension_numbers<[1], [0], [0], [1], [0, 0, 1, 1], [], []>} : vector<4x32xf32>, vector<32x4xf32>, vector<4x4xf32> -> vector<4x4xf32>
      %c0_24 = arith.constant 0 : index
      %c0_25 = arith.constant 0 : index
      %23 = vector.load %arg7[%c0_24, %c0_25] : memref<4x32xf32, #tpu.memory_space<vmem>>, vector<4x32xf32>
      %cst_26 = arith.constant dense<0.000000e+00> : vector<4x32xf32>
      %24 = tpu.matmul %22, %23, %cst_26 {dimension_numbers = #tpu.dot_dimension_numbers<[1], [0], [0], [1], [0, 0, 1, 1], [], []>} : vector<4x4xf32>, vector<4x32xf32>, vector<4x32xf32> -> vector<4x32xf32>
      %25 = arith.addf %20, %24 : vector<4x32xf32>
      %c0_27 = arith.constant 0 : index
      %c0_28 = arith.constant 0 : index
      %26 = vector.load %arg5[%c0_27, %c0_28] : memref<1x32xf32, #tpu.memory_space<vmem>>, vector<1x32xf32>
      %27 = vector.broadcast %26 : vector<1x32xf32> to vector<4x32xf32>
      %28 = arith.addf %25, %27 : vector<4x32xf32>
      %29 = vector.extract_strided_slice %28 {offsets = [0, 0], sizes = [2, 32], strides = [1, 1]} : vector<4x32xf32> to vector<2x32xf32>
      %c0_29 = arith.constant 0 : index
      %c0_30 = arith.constant 0 : index
      %30 = vector.load %arg8[%c0_29, %c0_30] : memref<2x32xf32, #tpu.memory_space<vmem>>, vector<2x32xf32>
      tpu.vector_store %arg8[%c0_29, %c0_30], %29 {strides = array<i32>} : memref<2x32xf32, #tpu.memory_space<vmem>>, vector<2x32xf32>,
      %31 = vector.extract_strided_slice %28 {offsets = [2, 0], sizes = [2, 32], strides = [1, 1]} : vector<4x32xf32> to vector<2x32xf32>
      %c0_31 = arith.constant 0 : index
      %c0_32 = arith.constant 0 : index
      %32 = vector.load %arg9[%c0_31, %c0_32] : memref<2x32xf32, #tpu.memory_space<vmem>>, vector<2x32xf32>
      tpu.vector_store %arg9[%c0_31, %c0_32], %31 {strides = array<i32>} : memref<2x32xf32, #tpu.memory_space<vmem>>, vector<2x32xf32>,
    } else {
    }
    return
  }
  func.func @transform_0(%arg0: i32, %arg1: i32) -> (i32, i32, i32) {
    %c0_i32 = arith.constant 0 : i32
    %c0_i32_0 = arith.constant 0 : i32
    return %arg0, %arg1, %c0_i32 : i32, i32, i32
  }
  func.func @transform_1(%arg0: i32, %arg1: i32) -> (i32, i32, i32) {
    %c0_i32 = arith.constant 0 : i32
    %c0_i32_0 = arith.constant 0 : i32
    return %arg0, %arg1, %c0_i32 : i32, i32, i32
  }
  func.func @transform_2(%arg0: i32, %arg1: i32) -> (i32, i32) {
    %c0_i32 = arith.constant 0 : i32
    %c0_i32_0 = arith.constant 0 : i32
    %c0_i32_1 = arith.constant 0 : i32
    return %c0_i32, %c0_i32_0 : i32, i32
  }
  func.func @transform_3(%arg0: i32, %arg1: i32) -> (i32, i32) {
    %c0_i32 = arith.constant 0 : i32
    %c0_i32_0 = arith.constant 0 : i32
    %c0_i32_1 = arith.constant 0 : i32
    return %c0_i32, %c0_i32_0 : i32, i32
  }
  func.func @transform_4(%arg0: i32, %arg1: i32) -> (i32, i32) {
    %c0_i32 = arith.constant 0 : i32
    %c0_i32_0 = arith.constant 0 : i32
    %c0_i32_1 = arith.constant 0 : i32
    return %c0_i32, %c0_i32_0 : i32, i32
  }
  func.func @transform_5(%arg0: i32, %arg1: i32) -> (i32, i32) {
    %c0_i32 = arith.constant 0 : i32
    %c0_i32_0 = arith.constant 0 : i32
    %c0_i32_1 = arith.constant 0 : i32
    return %c0_i32, %c0_i32_0 : i32, i32
  }
  func.func @transform_6(%arg0: i32, %arg1: i32) -> (i32, i32) {
    %c0_i32 = arith.constant 0 : i32
    %c0_i32_0 = arith.constant 0 : i32
    return %arg0, %c0_i32 : i32, i32
  }
  func.func @transform_7(%arg0: i32, %arg1: i32) -> (i32, i32) {
    %c0_i32 = arith.constant 0 : i32
    %c0_i32_0 = arith.constant 0 : i32
    return %arg0, %c0_i32 : i32, i32
  }
}

module attributes {stable_mosaic.version = 11 : i64} {
  func.func @kernel(%arg0: i32, %arg1: i32, %arg2: memref<2x8x32xf32, #tpu.memory_space<vmem>>, %arg3: memref<2x8x32xf32, #tpu.memory_space<vmem>>, %arg4: memref<32x32xf32, #tpu.memory_space<vmem>>, %arg5: memref<1x32xf32, #tpu.memory_space<vmem>>, %arg6: memref<32x4xf32, #tpu.memory_space<vmem>>, %arg7: memref<4x32xf32, #tpu.memory_space<vmem>>, %arg8: memref<2x32xf32, #tpu.memory_space<vmem>>, %arg9: memref<2x32xf32, #tpu.memory_space<vmem>>, %arg10: memref<4x32xf32, #tpu.memory_space<vmem>>) attributes {dimension_semantics = [#tpu.dimension_semantics<parallel>, #tpu.dimension_semantics<arbitrary>], iteration_bounds = array<i64: 1, 2>, scalar_prefetch = 0 : i64, scratch_operands = 1 : i64, tpu.core_type = #tpu.core_type<tc>, window_params = [{transform_indices = @transform_0, window_bounds = array<i64: 2, 8, 32>}, {transform_indices = @transform_1, window_bounds = array<i64: 2, 8, 32>}, {pipeline_mode = #tpu.pipeline_mode<synchronous>, transform_indices = @transform_2, window_bounds = array<i64: 32, 32>}, {pipeline_mode = #tpu.pipeline_mode<synchronous>, transform_indices = @transform_3, window_bounds = array<i64: 1, 32>}, {pipeline_mode = #tpu.pipeline_mode<synchronous>, transform_indices = @transform_4, window_bounds = array<i64: 32, 4>}, {pipeline_mode = #tpu.pipeline_mode<synchronous>, transform_indices = @transform_5, window_bounds = array<i64: 4, 32>}, {transform_indices = @transform_6, window_bounds = array<i64: 2, 32>}, {transform_indices = @transform_7, window_bounds = array<i64: 2, 32>}]} {
    %c0_i32 = arith.constant 0 : i32
    %0 = arith.cmpi eq, %arg1, %c0_i32 : i32
    %1 = arith.extui %0 : i1 to i32
    %c0_i32_0 = arith.constant 0 : i32
    %2 = arith.cmpi ne, %1, %c0_i32_0 : i32
    scf.if %2 {
      %cst_15 = arith.constant 0.000000e+00 : f32
      %16 = vector.broadcast %cst_15 : f32 to vector<4x32xf32>
      %c0_16 = arith.constant 0 : index
      %c0_17 = arith.constant 0 : index
      %17 = vector.load %arg10[%c0_16, %c0_17] : memref<4x32xf32, #tpu.memory_space<vmem>>, vector<4x32xf32>
      tpu.vector_store %arg10[%c0_16, %c0_17], %16 {strides = array<i32>} : memref<4x32xf32, #tpu.memory_space<vmem>>, vector<4x32xf32>,
    } else {
    }
    %c0 = arith.constant 0 : index
    %c0_1 = arith.constant 0 : index
    %c0_2 = arith.constant 0 : index
    %3 = vector.load %arg2[%c0, %c0_1, %c0_2] : memref<2x8x32xf32, #tpu.memory_space<vmem>>, vector<2x8x32xf32>
    %c0_3 = arith.constant 0 : index
    %c0_4 = arith.constant 0 : index
    %c0_5 = arith.constant 0 : index
    %4 = vector.load %arg3[%c0_3, %c0_4, %c0_5] : memref<2x8x32xf32, #tpu.memory_space<vmem>>, vector<2x8x32xf32>
    %c0_6 = arith.constant 0 : index
    %c0_7 = arith.constant 0 : index
    %5 = vector.load %arg10[%c0_6, %c0_7] : memref<4x32xf32, #tpu.memory_space<vmem>>, vector<2x32xf32>
    %cst = arith.constant dense<0.000000e+00> : vector<2x32xf32>
    %6 = vector.multi_reduction <add>, %3, %cst [1] : vector<2x8x32xf32> to vector<2x32xf32>
    %7 = arith.addf %5, %6 : vector<2x32xf32>
    %c0_8 = arith.constant 0 : index
    %c0_9 = arith.constant 0 : index
    %8 = vector.load %arg10[%c0_8, %c0_9] : memref<4x32xf32, #tpu.memory_space<vmem>>, vector<2x32xf32>
    tpu.vector_store %arg10[%c0_8, %c0_9], %7 {strides = array<i32>} : memref<4x32xf32, #tpu.memory_space<vmem>>, vector<2x32xf32>,
    %c2 = arith.constant 2 : index
    %c0_10 = arith.constant 0 : index
    %9 = vector.load %arg10[%c2, %c0_10] : memref<4x32xf32, #tpu.memory_space<vmem>>, vector<2x32xf32>
    %cst_11 = arith.constant dense<0.000000e+00> : vector<2x32xf32>
    %10 = vector.multi_reduction <add>, %4, %cst_11 [1] : vector<2x8x32xf32> to vector<2x32xf32>
    %11 = arith.addf %9, %10 : vector<2x32xf32>
    %c2_12 = arith.constant 2 : index
    %c0_13 = arith.constant 0 : index
    %12 = vector.load %arg10[%c2_12, %c0_13] : memref<4x32xf32, #tpu.memory_space<vmem>>, vector<2x32xf32>
    tpu.vector_store %arg10[%c2_12, %c0_13], %11 {strides = array<i32>} : memref<4x32xf32, #tpu.memory_space<vmem>>, vector<2x32xf32>,
    %c1_i32 = arith.constant 1 : i32
    %13 = arith.cmpi eq, %arg1, %c1_i32 : i32
    %14 = arith.extui %13 : i1 to i32
    %c0_i32_14 = arith.constant 0 : i32
    %15 = arith.cmpi ne, %14, %c0_i32_14 : i32
    scf.if %15 {
      %c0_15 = arith.constant 0 : index
      %c0_16 = arith.constant 0 : index
      %16 = vector.load %arg10[%c0_15, %c0_16] : memref<4x32xf32, #tpu.memory_space<vmem>>, vector<4x32xf32>
      %cst_17 = arith.constant 6.250000e-02 : f32
      %17 = vector.broadcast %cst_17 : f32 to vector<4x32xf32>
      %18 = arith.mulf %16, %17 : vector<4x32xf32>
      %c0_18 = arith.constant 0 : index
      %c0_19 = arith.constant 0 : index
      %19 = vector.load %arg4[%c0_18, %c0_19] : memref<32x32xf32, #tpu.memory_space<vmem>>, vector<32x32xf32>
      %cst_20 = arith.constant dense<0.000000e+00> : vector<4x32xf32>
      %20 = tpu.matmul %18, %19, %cst_20 {dimension_numbers = #tpu.dot_dimension_numbers<[1], [0], [0], [1], [0, 0, 1, 1], [], []>} : vector<4x32xf32>, vector<32x32xf32>, vector<4x32xf32> -> vector<4x32xf32>
      %c0_21 = arith.constant 0 : index
      %c0_22 = arith.constant 0 : index
      %21 = vector.load %arg6[%c0_21, %c0_22] : memref<32x4xf32, #tpu.memory_space<vmem>>, vector<32x4xf32>
      %cst_23 = arith.constant dense<0.000000e+00> : vector<4x4xf32>
      %22 = tpu.matmul %18, %21, %cst_23 {dimension_numbers = #tpu.dot_dimension_numbers<[1], [0], [0], [1], [0, 0, 1, 1], [], []>} : vector<4x32xf32>, vector<32x4xf32>, vector<4x4xf32> -> vector<4x4xf32>
      %c0_24 = arith.constant 0 : index
      %c0_25 = arith.constant 0 : index
      %23 = vector.load %arg7[%c0_24, %c0_25] : memref<4x32xf32, #tpu.memory_space<vmem>>, vector<4x32xf32>
      %cst_26 = arith.constant dense<0.000000e+00> : vector<4x32xf32>
      %24 = tpu.matmul %22, %23, %cst_26 {dimension_numbers = #tpu.dot_dimension_numbers<[1], [0], [0], [1], [0, 0, 1, 1], [], []>} : vector<4x4xf32>, vector<4x32xf32>, vector<4x32xf32> -> vector<4x32xf32>
      %25 = arith.addf %20, %24 : vector<4x32xf32>
      %c0_27 = arith.constant 0 : index
      %c0_28 = arith.constant 0 : index
      %26 = vector.load %arg5[%c0_27, %c0_28] : memref<1x32xf32, #tpu.memory_space<vmem>>, vector<1x32xf32>
      %27 = vector.broadcast %26 : vector<1x32xf32> to vector<4x32xf32>
      %28 = arith.addf %25, %27 : vector<4x32xf32>
      %29 = vector.extract_strided_slice %28 {offsets = [0, 0], sizes = [2, 32], strides = [1, 1]} : vector<4x32xf32> to vector<2x32xf32>
      %c0_29 = arith.constant 0 : index
      %c0_30 = arith.constant 0 : index
      %30 = vector.load %arg8[%c0_29, %c0_30] : memref<2x32xf32, #tpu.memory_space<vmem>>, vector<2x32xf32>
      tpu.vector_store %arg8[%c0_29, %c0_30], %29 {strides = array<i32>} : memref<2x32xf32, #tpu.memory_space<vmem>>, vector<2x32xf32>,
      %31 = vector.extract_strided_slice %28 {offsets = [2, 0], sizes = [2, 32], strides = [1, 1]} : vector<4x32xf32> to vector<2x32xf32>
      %c0_31 = arith.constant 0 : index
      %c0_32 = arith.constant 0 : index
      %32 = vector.load %arg9[%c0_31, %c0_32] : memref<2x32xf32, #tpu.memory_space<vmem>>, vector<2x32xf32>
      tpu.vector_store %arg9[%c0_31, %c0_32], %31 {strides = array<i32>} : memref<2x32xf32, #tpu.memory_space<vmem>>, vector<2x32xf32>,
    } else {
    }
    return
  }
  func.func @transform_0(%arg0: i32, %arg1: i32) -> (i32, i32, i32) {
    %c0_i32 = arith.constant 0 : i32
    %c0_i32_0 = arith.constant 0 : i32
    return %arg0, %arg1, %c0_i32 : i32, i32, i32
  }
  func.func @transform_1(%arg0: i32, %arg1: i32) -> (i32, i32, i32) {
    %c0_i32 = arith.constant 0 : i32
    %c0_i32_0 = arith.constant 0 : i32
    return %arg0, %arg1, %c0_i32 : i32, i32, i32
  }
  func.func @transform_2(%arg0: i32, %arg1: i32) -> (i32, i32) {
    %c0_i32 = arith.constant 0 : i32
    %c0_i32_0 = arith.constant 0 : i32
    %c0_i32_1 = arith.constant 0 : i32
    return %c0_i32, %c0_i32_0 : i32, i32
  }
  func.func @transform_3(%arg0: i32, %arg1: i32) -> (i32, i32) {
    %c0_i32 = arith.constant 0 : i32
    %c0_i32_0 = arith.constant 0 : i32
    %c0_i32_1 = arith.constant 0 : i32
    return %c0_i32, %c0_i32_0 : i32, i32
  }
  func.func @transform_4(%arg0: i32, %arg1: i32) -> (i32, i32) {
    %c0_i32 = arith.constant 0 : i32
    %c0_i32_0 = arith.constant 0 : i32
    %c0_i32_1 = arith.constant 0 : i32
    return %c0_i32, %c0_i32_0 : i32, i32
  }
  func.func @transform_5(%arg0: i32, %arg1: i32) -> (i32, i32) {
    %c0_i32 = arith.constant 0 : i32
    %c0_i32_0 = arith.constant 0 : i32
    %c0_i32_1 = arith.constant 0 : i32
    return %c0_i32, %c0_i32_0 : i32, i32
  }
  func.func @transform_6(%arg0: i32, %arg1: i32) -> (i32, i32) {
    %c0_i32 = arith.constant 0 : i32
    %c0_i32_0 = arith.constant 0 : i32
    return %arg0, %c0_i32 : i32, i32
  }
  func.func @transform_7(%arg0: i32, %arg1: i32) -> (i32, i32) {
    %c0_i32 = arith.constant 0 : i32
    %c0_i32_0 = arith.constant 0 : i32
    return %arg0, %c0_i32 : i32, i32
  }
}

</mosaic_0001>

<llo_original>
// kernel: tpu_custom_call.1
$region0: #{tpu_custom_call.1}
  #allocation0 [shape = 'u32[]', space=smem, size = 0x4, offset = 0x4, fixed_abs, tag = 'smem constant byte address 0x4 - core index']
  #allocation1 [shape = 'u32[144,128]{1,0:T(1,128)}', space=vmem, size = 0x12000, scoped, tag = 'internal scratch']
  #allocation2 [shape = 'f32[4,32]{1,0:T(4,128)}', space=vmem, size = 0x800, scoped, tag = 'scratch operand']
  %s0 = inlined_call_operand.vmem [shape: f32[2,16,32], index: 0, kind: input, shape index: {}]
  %s1 = inlined_call_operand.hbm [shape: f32[2,16,32], index: 1, kind: input, shape index: {}]
  %s2 = inlined_call_operand.hbm [shape: f32[32,32], index: 2, kind: input, shape index: {}]
  %s3 = inlined_call_operand.vmem [shape: f32[1,32], index: 3, kind: input, shape index: {}]
  %s4 = inlined_call_operand.vmem [shape: f32[32,4], index: 4, kind: input, shape index: {}]
  %s5 = inlined_call_operand.vmem [shape: f32[4,32], index: 5, kind: input, shape index: {}]
  %s6 = inlined_call_operand.hbm [shape: f32[2,32], index: 6, kind: output, shape index: {0}]
  %s7 = inlined_call_operand.hbm [shape: f32[2,32], index: 7, kind: output, shape index: {1}]
  %8 = xla_tuple %s6, %s7
  %s9 = sld [smem:[#allocation0]]
  $region119: #{tpu_custom_call.1} parent=0
    _
  %s11 = ssub.s32 1, %s9
  %s12 = scalar_select 0, %s11, %s9
  $region1: #{tpu_custom_call.1} parent=0
    #allocation3 [shape = 'u8[16384]{0}', space=vmem, size = 0x4000, scoped, tag = 'input window, operand 0']
    #allocation4 [shape = 'u8[16384]{0}', space=vmem, size = 0x4000, scoped, tag = 'input window, operand 1']
    #allocation5 [shape = 's32[2]{0}', space=sflag, size = 0x8, scoped, tag = 'scoped memory for tpu_custom_call.1']
    #allocation6 [shape = 's32[2]{0}', space=sflag, size = 0x8, scoped, tag = 'scoped memory for tpu_custom_call.1']
    #allocation7 [shape = 'u8[16384]{0}', space=vmem, size = 0x4000, scoped, tag = 'input window, operand 2, single buffered']
    #allocation8 [shape = 's32[1]{0}', space=sflag, size = 0x4, scoped, tag = 'scoped memory for tpu_custom_call.1']
    #allocation9 [shape = 'u8[1024]{0}', space=vmem, size = 0x400, scoped, tag = 'output window, operand 0, single buffered']
    #allocation10 [shape = 'u8[1024]{0}', space=vmem, size = 0x400, scoped, tag = 'output window, operand 1, single buffered']
    #allocation11 [shape = 's32[1]{0}', space=sflag, size = 0x4, scoped, tag = 'scoped memory for tpu_custom_call.1']
    %13 = vsyncpa [#allocation5], 0
    %s14 = scalar_lea.sflag [#allocation5], 1
    %15 = vsyncpa %s14, 0
    %16 = vsyncpa [#allocation8], 0
    %17 = vsyncpa [#allocation6], 0
    %18 = vsyncpa [#allocation11], 0
    loop: start=0, step=1, limit=4
    $region2: #{tpu_custom_call.1} parent=1 // loop_pre_header
      _
    $region3: #{tpu_custom_call.1} parent=1 // loop_header
      %s20 = sphi 0, %s24
      %p21 = scmp.ge.s32.totalorder %s20, 4
      %s27 = sphi 0, %s39
      %s28 = sphi 0, %s35
      %s29 = sphi 0, %s27
      %s30 = sphi 0, %s28
      %s31 = sphi 0, %s29
      %s32 = sphi 0, %s30
      %s44 = sphi 0, %s46
      %s47 = sphi 0, %s44
      %s48 = sphi 0, %s47
      %s64 = sphi 0, %s48
      %s72 = sphi 0, %s74
      %s75 = sphi 0, %s72
      %s76 = sphi 0, %s75
      %s92 = sphi 0, %s76
      %s96 = sphi 0, %s96
      %s98 = sphi 0, %s96
      %s99 = sphi 0, %s98
      %s113 = sphi 0, %s99
      %s117 = sphi 0, %s117
      %s119 = sphi 0, %s117
      %s120 = sphi 0, %s119
      %s134 = sphi 0, %s120
      %s138 = sphi 0, %s138
      %s140 = sphi 0, %s138
      %s141 = sphi 0, %s140
      %s155 = sphi 0, %s141
      %s159 = sphi 0, %s159
      %s161 = sphi 0, %s159
      %s162 = sphi 0, %s161
      %s176 = sphi 0, %s162
      %s182 = sphi 0, %s184
      %s185 = sphi 0, %s182
      %s186 = sphi 0, %s185
      %s202 = sphi 0, %s186
      %s208 = sphi 0, %s210
      %s211 = sphi 0, %s208
      %s212 = sphi 0, %s211
      %s228 = sphi 0, %s212
    $region4: #{tpu_custom_call.1} parent=1 // loop_header_branch
      %23 = sbr.rel (%p21) target = $region8
    $region5: #{tpu_custom_call.1} parent=1 // loop_body
      %s25 = ssub.s32 %s20, 1
      %s26 = ssub.s32 %s20, 2
      %s33 = sadd.s32 1, %s28
      %p34 = scmp.ge.s32.totalorder %s33, 2
      %s35 = scalar_select %p34, 0, %s33
      %s36 = sadd.s32 1, %s27
      %s37 = scalar_select %p34, %s36, %s27
      %p38 = scmp.ge.s32.totalorder %s37, 1
      %s39 = scalar_select %p38, 0, %s37
      %s40 = ssub.s32 %s27, %s39
      %s41 = ssub.s32 %s28, %s35
      %s42 = sor.u32 %s40, %s41
      %p43 = scmp.eq.s32.totalorder %s42, 0
      %s45 = sadd.s32 %s44, 1
      %s46 = scalar_select %p43, %s44, %s45
      %p49 = pneg %p43
      %p50 = scmp.eq.s32.totalorder %s20, 1
      %p51 = por %p49, %p50
      %p52 = scmp.ne.s32.totalorder %s44, %s47
      %p53 = scmp.eq.s32.totalorder %s20, 0
      %p54 = por %p52, %p53
      %p55 = scmp.ne.s32.totalorder %s44, %s47
      %p56 = scmp.eq.s32.totalorder %s25, 1
      %p57 = por %p55, %p56
      %p58 = scmp.ne.s32.totalorder %s47, %s48
      %p59 = scmp.eq.s32.totalorder %s25, 0
      %p60 = por %p58, %p59
      %p61 = scmp.ne.s32.totalorder %s47, %s48
      %p62 = scmp.eq.s32.totalorder %s26, 1
      %p63 = por %p61, %p62
      %p65 = scmp.ne.s32.totalorder %s48, %s64
      %p66 = scmp.eq.s32.totalorder %s26, 0
      %p67 = por %p65, %p66
      %s68 = ssub.s32 %s27, %s39
      %s69 = ssub.s32 %s28, %s35
      %s70 = sor.u32 %s68, %s69
      %p71 = scmp.eq.s32.totalorder %s70, 0
      %s73 = sadd.s32 %s72, 1
      %s74 = scalar_select %p71, %s72, %s73
      %p77 = pneg %p71
      %p78 = scmp.eq.s32.totalorder %s20, 1
      %p79 = por %p77, %p78
      %p80 = scmp.ne.s32.totalorder %s72, %s75
      %p81 = scmp.eq.s32.totalorder %s20, 0
      %p82 = por %p80, %p81
      %p83 = scmp.ne.s32.totalorder %s72, %s75
      %p84 = scmp.eq.s32.totalorder %s25, 1
      %p85 = por %p83, %p84
      %p86 = scmp.ne.s32.totalorder %s75, %s76
      %p87 = scmp.eq.s32.totalorder %s25, 0
      %p88 = por %p86, %p87
      %p89 = scmp.ne.s32.totalorder %s75, %s76
      %p90 = scmp.eq.s32.totalorder %s26, 1
      %p91 = por %p89, %p90
      %p93 = scmp.ne.s32.totalorder %s76, %s92
      %p94 = scmp.eq.s32.totalorder %s26, 0
      %p95 = por %p93, %p94
      %s97 = sadd.s32 %s96, 1
      %p100 = scmp.eq.s32.totalorder %s20, 1
      %p101 = scmp.ne.s32.totalorder %s96, %s98
      %p102 = scmp.eq.s32.totalorder %s20, 0
      %p103 = por %p101, %p102
      %p104 = scmp.ne.s32.totalorder %s96, %s98
      %p105 = scmp.eq.s32.totalorder %s25, 1
      %p106 = por %p104, %p105
      %p107 = scmp.ne.s32.totalorder %s98, %s99
      %p108 = scmp.eq.s32.totalorder %s25, 0
      %p109 = por %p107, %p108
      %p110 = scmp.ne.s32.totalorder %s98, %s99
      %p111 = scmp.eq.s32.totalorder %s26, 1
      %p112 = por %p110, %p111
      %p114 = scmp.ne.s32.totalorder %s99, %s113
      %p115 = scmp.eq.s32.totalorder %s26, 0
      %p116 = por %p114, %p115
      %s118 = sadd.s32 %s117, 1
      %p121 = scmp.eq.s32.totalorder %s20, 1
      %p122 = scmp.ne.s32.totalorder %s117, %s119
      %p123 = scmp.eq.s32.totalorder %s20, 0
      %p124 = por %p122, %p123
      %p125 = scmp.ne.s32.totalorder %s117, %s119
      %p126 = scmp.eq.s32.totalorder %s25, 1
      %p127 = por %p125, %p126
      %p128 = scmp.ne.s32.totalorder %s119, %s120
      %p129 = scmp.eq.s32.totalorder %s25, 0
      %p130 = por %p128, %p129
      %p131 = scmp.ne.s32.totalorder %s119, %s120
      %p132 = scmp.eq.s32.totalorder %s26, 1
      %p133 = por %p131, %p132
      %p135 = scmp.ne.s32.totalorder %s120, %s134
      %p136 = scmp.eq.s32.totalorder %s26, 0
      %p137 = por %p135, %p136
      %s139 = sadd.s32 %s138, 1
      %p142 = scmp.eq.s32.totalorder %s20, 1
      %p143 = scmp.ne.s32.totalorder %s138, %s140
      %p144 = scmp.eq.s32.totalorder %s20, 0
      %p145 = por %p143, %p144
      %p146 = scmp.ne.s32.totalorder %s138, %s140
      %p147 = scmp.eq.s32.totalorder %s25, 1
      %p148 = por %p146, %p147
      %p149 = scmp.ne.s32.totalorder %s140, %s141
      %p150 = scmp.eq.s32.totalorder %s25, 0
      %p151 = por %p149, %p150
      %p152 = scmp.ne.s32.totalorder %s140, %s141
      %p153 = scmp.eq.s32.totalorder %s26, 1
      %p154 = por %p152, %p153
      %p156 = scmp.ne.s32.totalorder %s141, %s155
      %p157 = scmp.eq.s32.totalorder %s26, 0
      %p158 = por %p156, %p157
      %s160 = sadd.s32 %s159, 1
      %p163 = scmp.eq.s32.totalorder %s20, 1
      %p164 = scmp.ne.s32.totalorder %s159, %s161
      %p165 = scmp.eq.s32.totalorder %s20, 0
      %p166 = por %p164, %p165
      %p167 = scmp.ne.s32.totalorder %s159, %s161
      %p168 = scmp.eq.s32.totalorder %s25, 1
      %p169 = por %p167, %p168
      %p170 = scmp.ne.s32.totalorder %s161, %s162
      %p171 = scmp.eq.s32.totalorder %s25, 0
      %p172 = por %p170, %p171
      %p173 = scmp.ne.s32.totalorder %s161, %s162
      %p174 = scmp.eq.s32.totalorder %s26, 1
      %p175 = por %p173, %p174
      %p177 = scmp.ne.s32.totalorder %s162, %s176
      %p178 = scmp.eq.s32.totalorder %s26, 0
      %p179 = por %p177, %p178
      %s180 = ssub.s32 %s27, %s39
      %p181 = scmp.eq.s32.totalorder %s180, 0
      %s183 = sadd.s32 %s182, 1
      %s184 = scalar_select %p181, %s182, %s183
      %p187 = pneg %p181
      %p188 = scmp.eq.s32.totalorder %s20, 1
      %p189 = por %p187, %p188
      %p190 = scmp.ne.s32.totalorder %s182, %s185
      %p191 = scmp.eq.s32.totalorder %s20, 0
      %p192 = por %p190, %p191
      %p193 = scmp.ne.s32.totalorder %s182, %s185
      %p194 = scmp.eq.s32.totalorder %s25, 1
      %p195 = por %p193, %p194
      %p196 = scmp.ne.s32.totalorder %s185, %s186
      %p197 = scmp.eq.s32.totalorder %s25, 0
      %p198 = por %p196, %p197
      %p199 = scmp.ne.s32.totalorder %s185, %s186
      %p200 = scmp.eq.s32.totalorder %s26, 1
      %p201 = por %p199, %p200
      %p203 = scmp.ne.s32.totalorder %s186, %s202
      %p204 = scmp.eq.s32.totalorder %s26, 0
      %p205 = por %p203, %p204
      %s206 = ssub.s32 %s27, %s39
      %p207 = scmp.eq.s32.totalorder %s206, 0
      %s209 = sadd.s32 %s208, 1
      %s210 = scalar_select %p207, %s208, %s209
      %p213 = pneg %p207
      %p214 = scmp.eq.s32.totalorder %s20, 1
      %p215 = por %p213, %p214
      %p216 = scmp.ne.s32.totalorder %s208, %s211
      %p217 = scmp.eq.s32.totalorder %s20, 0
      %p218 = por %p216, %p217
      %p219 = scmp.ne.s32.totalorder %s208, %s211
      %p220 = scmp.eq.s32.totalorder %s25, 1
      %p221 = por %p219, %p220
      %p222 = scmp.ne.s32.totalorder %s211, %s212
      %p223 = scmp.eq.s32.totalorder %s25, 0
      %p224 = por %p222, %p223
      %p225 = scmp.ne.s32.totalorder %s211, %s212
      %p226 = scmp.eq.s32.totalorder %s26, 1
      %p227 = por %p225, %p226
      %p229 = scmp.ne.s32.totalorder %s212, %s228
      %p230 = scmp.eq.s32.totalorder %s26, 0
      %p231 = por %p229, %p230
      %p232 = scmp.le.s32.totalorder 1, %s20
      %p233 = scmp.lt.s32.totalorder %s20, 3
      %p234 = pnand %p232, %p233
      %p235 = pneg %p234
      // Predicated region
      $region9: #{tpu_custom_call.1} parent=5 // pred_check
        _
      $region10: #{tpu_custom_call.1} parent=5 // pred_check_branch
        %237 = sbr.rel (%p234) target = $region12
      $region11: #{tpu_custom_call.1} parent=5 // pred_region
        %s238 = ssub.s32 %s20, 1
        // Predicated region
        $region13: #{tpu_custom_call.1} parent=11 // pred_check
          %p239 = pneg %p109
        $region14: #{tpu_custom_call.1} parent=11 // pred_check_branch
          %241 = sbr.rel (%p239) target = $region16
        $region15: #{tpu_custom_call.1} parent=11 // pred_region
          %s243 = ssub.s32 512, 512
          %244 = vsyncadd [#allocation8], %s243
          %s245 = sshll.u32 [#allocation7], 4
          %s246 = int_to_ptr.vmem [resolvable:$true] %s245
          %251 = dma.hbm_to_vmem [thread:$0]  %s2, 512, %s246, [#allocation8], 128, 128, 8
        $region16: #{tpu_custom_call.1} parent=11 // pred_fallthru
          _
        // Predicated region
        $region17: #{tpu_custom_call.1} parent=11 // pred_check
          %p252 = pneg %p130
        $region18: #{tpu_custom_call.1} parent=11 // pred_check_branch
          %254 = sbr.rel (%p252) target = $region20
        $region19: #{tpu_custom_call.1} parent=11 // pred_region
          _
        $region20: #{tpu_custom_call.1} parent=11 // pred_fallthru
          _
        // Predicated region
        $region21: #{tpu_custom_call.1} parent=11 // pred_check
          %p255 = pneg %p151
        $region22: #{tpu_custom_call.1} parent=11 // pred_check_branch
          %257 = sbr.rel (%p255) target = $region24
        $region23: #{tpu_custom_call.1} parent=11 // pred_region
          _
        $region24: #{tpu_custom_call.1} parent=11 // pred_fallthru
          _
        // Predicated region
        $region25: #{tpu_custom_call.1} parent=11 // pred_check
          %p258 = pneg %p172
        $region26: #{tpu_custom_call.1} parent=11 // pred_check_branch
          %260 = sbr.rel (%p258) target = $region28
        $region27: #{tpu_custom_call.1} parent=11 // pred_region
          _
        $region28: #{tpu_custom_call.1} parent=11 // pred_fallthru
          _
      $region12: #{tpu_custom_call.1} parent=5 // pred_fallthru
        _
      %p261 = scmp.lt.s32.totalorder %s20, 2
      // Predicated region
      $region29: #{tpu_custom_call.1} parent=5 // pred_check
        %p262 = pneg %p261
      $region30: #{tpu_custom_call.1} parent=5 // pred_check_branch
        %264 = sbr.rel (%p262) target = $region32
      $region31: #{tpu_custom_call.1} parent=5 // pred_region
        // Predicated region
        $region33: #{tpu_custom_call.1} parent=31 // pred_check
          %p265 = pneg %p54
        $region34: #{tpu_custom_call.1} parent=31 // pred_check_branch
          %267 = sbr.rel (%p265) target = $region36
        $region35: #{tpu_custom_call.1} parent=31 // pred_region
          %s268 = sand.u32 %s44, 1
          %s269 = sand.u32 %s44, 1
          %s270 = smul.addr %s269, 16
          %s271 = scalar_lea.vmem [#allocation3], %s270
          %s272 = smul.u32 2, %s27
          %s273 = smul.addr %s272, 2
          %s274 = sadd.s32 %s28, %s273
          %s275 = smul.addr %s274, 8
          %s276 = scalar_lea.vmem %s0, %s275
          // Predicated region
          $region37: #{tpu_custom_call.1} parent=35 // pred_check
            _
          $region38: #{tpu_custom_call.1} parent=35 // pred_check_branch
            %278 = sbr.rel (0) target = $region40
          $region39: #{tpu_custom_call.1} parent=35 // pred_region
            // Predicated region
            $region41: #{tpu_custom_call.1} parent=39 // pred_check
              _
            $region42: #{tpu_custom_call.1} parent=39 // pred_check_branch
              %280 = sbr.rel (0) target = $region44
            $region43: #{tpu_custom_call.1} parent=39 // pred_region
              // Predicated region
              $region56: #{tpu_custom_call.1} parent=43 // pred_check
                _
              $region57: #{tpu_custom_call.1} parent=43 // pred_check_branch
                %297 = sbr.rel (0) target = $region59
              $region58: #{tpu_custom_call.1} parent=43 // pred_region
                loop: start=0, step=1, limit=1
                $region60: #{tpu_custom_call.1} parent=58 // loop_pre_header
                  _
                $region61: #{tpu_custom_call.1} parent=58 // loop_header
                  %s299 = sphi 0, %s303
                  %p300 = scmp.ge.s32.totalorder %s299, 1
                  %s304 = sphi %s276, %s276
                  %s305 = sphi %s271, %s271
                $region62: #{tpu_custom_call.1} parent=58 // loop_header_branch
                  %302 = sbr.rel (%p300) target = $region66
                $region63: #{tpu_custom_call.1} parent=58 // loop_body
                  %v306 = vld [vmem:[%s304] sm:$0xff]
                  %307 = vst [vmem:[%s305] sm:$0xff] %v306
                  %v308 = vld [vmem:[%s304 + $0x10] sm:$0xff]
                  %309 = vst [vmem:[%s305 + $0x8] sm:$0xff] %v308
                $region64: #{tpu_custom_call.1} parent=58 // loop_footer
                  %s303 = sadd.s32 1, %s299
                $region65: #{tpu_custom_call.1} parent=58 // loop_footer_branch
                  %298 = sbr.rel target = $region61
                $region66: #{tpu_custom_call.1} parent=58 // loop_exit
                  _
              $region59: #{tpu_custom_call.1} parent=43 // pred_fallthru
                _
              // Predicated region
              $region67: #{tpu_custom_call.1} parent=43 // pred_check
                _
              $region68: #{tpu_custom_call.1} parent=43 // pred_check_branch
                %311 = sbr.rel target = $region70
              $region69: #{tpu_custom_call.1} parent=43 // pred_region
                _
              $region70: #{tpu_custom_call.1} parent=43 // pred_fallthru
                _
            $region44: #{tpu_custom_call.1} parent=39 // pred_fallthru
              _
            // Predicated region
            $region45: #{tpu_custom_call.1} parent=39 // pred_check
              _
            $region46: #{tpu_custom_call.1} parent=39 // pred_check_branch
              %282 = sbr.rel target = $region48
            $region47: #{tpu_custom_call.1} parent=39 // pred_region
              loop: start=0, step=1, limit=1
              $region49: #{tpu_custom_call.1} parent=47 // loop_pre_header
                _
              $region50: #{tpu_custom_call.1} parent=47 // loop_header
                %s285 = sphi 0, %s289
                %p286 = scmp.ge.s32.totalorder %s285, 1
                %s290 = sphi %s276, %s276
                %s291 = sphi %s271, %s271
              $region51: #{tpu_custom_call.1} parent=47 // loop_header_branch
                %288 = sbr.rel (%p286) target = $region55
              $region52: #{tpu_custom_call.1} parent=47 // loop_body
                %v292 = vld [vmem:[%s290] sm:$0xff]
                %293 = vst [vmem:[%s291] sm:$0xff] %v292
                %v294 = vld [vmem:[%s290 + $0x10] sm:$0xff]
                %295 = vst [vmem:[%s291 + $0x8] sm:$0xff] %v294
              $region53: #{tpu_custom_call.1} parent=47 // loop_footer
                %s289 = sadd.s32 1, %s285
              $region54: #{tpu_custom_call.1} parent=47 // loop_footer_branch
                %284 = sbr.rel target = $region50
              $region55: #{tpu_custom_call.1} parent=47 // loop_exit
                _
            $region48: #{tpu_custom_call.1} parent=39 // pred_fallthru
              _
          $region40: #{tpu_custom_call.1} parent=35 // pred_fallthru
            _
          %312 = vnop
        $region36: #{tpu_custom_call.1} parent=31 // pred_fallthru
          _
        // Predicated region
        $region71: #{tpu_custom_call.1} parent=31 // pred_check
          %p313 = pneg %p82
        $region72: #{tpu_custom_call.1} parent=31 // pred_check_branch
          %315 = sbr.rel (%p313) target = $region74
        $region73: #{tpu_custom_call.1} parent=31 // pred_region
          %s316 = sand.u32 %s72, 1
          %s317 = scalar_lea.sflag [#allocation5], %s316
          %s318 = sand.u32 %s72, 1
          %s319 = smul.addr %s318, 16
          %s320 = scalar_lea.vmem [#allocation4], %s319
          %s321 = smul.u32 2, %s27
          %s323 = ssub.s32 256, 256
          %324 = vsyncadd %s317, %s323
          %s325 = smul.addr %s321, 2
          %s326 = sadd.s32 %s28, %s325
          %s327 = smul.addr %s326, 128
          %s328 = scalar_lea.hbm %s1, %s327
          %s329 = sshll.u32 %s320, 4
          %s330 = int_to_ptr.vmem [resolvable:$true] %s329
          %335 = dma.hbm_to_vmem [thread:$0]  %s328, 256, %s330, %s317, 256, 128, 8
        $region74: #{tpu_custom_call.1} parent=31 // pred_fallthru
          _
      $region32: #{tpu_custom_call.1} parent=5 // pred_fallthru
        _
      %p336 = scmp.le.s32.totalorder 1, %s20
      %p337 = scmp.lt.s32.totalorder %s20, 3
      %p338 = pnand %p336, %p337
      %p339 = pneg %p338
      // Predicated region
      $region75: #{tpu_custom_call.1} parent=5 // pred_check
        _
      $region76: #{tpu_custom_call.1} parent=5 // pred_check_branch
        %341 = sbr.rel (%p338) target = $region78
      $region77: #{tpu_custom_call.1} parent=5 // pred_region
        %s342 = ssub.s32 %s20, 1
        %s343 = sand.u32 %s47, 1
        %s344 = sand.u32 %s47, 1
        %s345 = smul.addr %s344, 16
        %s346 = scalar_lea.vmem [#allocation3], %s345
        // Predicated region
        $region79: #{tpu_custom_call.1} parent=77 // pred_check
          %p347 = pneg %p60
        $region80: #{tpu_custom_call.1} parent=77 // pred_check_branch
          %349 = sbr.rel (%p347) target = $region82
        $region81: #{tpu_custom_call.1} parent=77 // pred_region
          _
        $region82: #{tpu_custom_call.1} parent=77 // pred_fallthru
          _
        %s350 = sand.u32 %s75, 1
        %s351 = scalar_lea.sflag [#allocation5], %s350
        %s352 = sand.u32 %s75, 1
        %s353 = smul.addr %s352, 16
        %s354 = scalar_lea.vmem [#allocation4], %s353
        // Predicated region
        $region83: #{tpu_custom_call.1} parent=77 // pred_check
          %p355 = pneg %p88
        $region84: #{tpu_custom_call.1} parent=77 // pred_check_branch
          %357 = sbr.rel (%p355) target = $region86
        $region85: #{tpu_custom_call.1} parent=77 // pred_region
          %358 = dma.done %s351, 256
        $region86: #{tpu_custom_call.1} parent=77 // pred_fallthru
          _
        // Predicated region
        $region87: #{tpu_custom_call.1} parent=77 // pred_check
          %p359 = pneg %p109
        $region88: #{tpu_custom_call.1} parent=77 // pred_check_branch
          %361 = sbr.rel (%p359) target = $region90
        $region89: #{tpu_custom_call.1} parent=77 // pred_region
          %362 = dma.done [#allocation8], 512
        $region90: #{tpu_custom_call.1} parent=77 // pred_fallthru
          _
        %s363 = sand.u32 %s47, 1
        %s364 = sand.u32 %s47, 1
        %s365 = smul.addr %s364, 16
        %s366 = scalar_lea.vmem [#allocation3], %s365
        %p367 = pneg %p60
        %p368 = pneg %p57
        %s369 = sand.u32 %s75, 1
        %s370 = scalar_lea.sflag [#allocation5], %s369
        %s371 = sand.u32 %s75, 1
        %s372 = smul.addr %s371, 16
        %s373 = scalar_lea.vmem [#allocation4], %s372
        %p374 = pneg %p88
        %p375 = pneg %p85
        %p376 = pneg %p109
        %p377 = pneg %p106
        %p378 = pneg %p130
        %p379 = pneg %p127
        %p380 = pneg %p151
        %p381 = pneg %p148
        %p382 = pneg %p172
        %p383 = pneg %p169
        %p384 = pneg %p198
        %p385 = pneg %p195
        %p386 = pneg %p224
        %p387 = pneg %p221
        %s388 = smul.u32 2, %s29
        %s389 = smul.u32 2, %s29
        %p390 = scmp.eq.s32.totalorder %s30, 0
        // Predicated region
        $region91: #{tpu_custom_call.1} parent=77 // pred_check
          %p391 = pneg %p390
        $region92: #{tpu_custom_call.1} parent=77 // pred_check_branch
          %393 = sbr.rel (%p391) target = $region94
        $region93: #{tpu_custom_call.1} parent=77 // pred_region
          %vm394 = vcmask 257024
          %395 = vst.msk [vmem:[#allocation2] sm:$0xf] %vm394, 0.0
        $region94: #{tpu_custom_call.1} parent=77 // pred_fallthru
          _
        %v396 = vld [vmem:[%s346] sm:$0xff]
        %v397 = vld [vmem:[%s346 + $0x8] sm:$0xff]
        %v398 = vld [vmem:[%s354] sm:$0xff]
        %v399 = vld [vmem:[%s354 + $0x8] sm:$0xff]
        %v400 = vld [vmem:[#allocation2] sm:$0x3]
        %vm401 = vcmask 261120
        %v402 = vsel %vm401, %v396, 0.0
        %v403 = vrot.slane %v402, 4
        %v404 = vadd.f32 %v402, %v403
        %v405 = vrot.slane %v404, 2
        %v406 = vadd.f32 %v404, %v405
        %v407 = vrot.slane %v406, 1
        %v408 = vadd.f32 %v406, %v407
        %v409 = vsel %vm401, %v397, 0.0
        %v410 = vrot.slane %v409, 4
        %v411 = vadd.f32 %v409, %v410
        %v412 = vrot.slane %v411, 2
        %v413 = vadd.f32 %v411, %v412
        %v414 = vrot.slane %v413, 1
        %v415 = vadd.f32 %v413, %v414
        %vm418 = vcmask 1041409
        %v419 = vsel %vm418, %v415, %v408
        %v421 = vadd.f32 %v400, %v419
        %vm422 = vcmask 254976
        %423 = vst.msk [vmem:[#allocation2] sm:$0x3] %vm422, %v421
        %v424 = vld [vmem:[#allocation2 + $0x2] sm:$0x3]
        %v425 = vsel %vm401, %v398, 0.0
        %v426 = vrot.slane %v425, 4
        %v427 = vadd.f32 %v425, %v426
        %v428 = vrot.slane %v427, 2
        %v429 = vadd.f32 %v427, %v428
        %v430 = vrot.slane %v429, 1
        %v431 = vadd.f32 %v429, %v430
        %v432 = vsel %vm401, %v399, 0.0
        %v433 = vrot.slane %v432, 4
        %v434 = vadd.f32 %v432, %v433
        %v435 = vrot.slane %v434, 2
        %v436 = vadd.f32 %v434, %v435
        %v437 = vrot.slane %v436, 1
        %v438 = vadd.f32 %v436, %v437
        %v441 = vsel %vm418, %v438, %v431
        %v443 = vadd.f32 %v424, %v441
        %444 = vst.msk [vmem:[#allocation2 + $0x2] sm:$0x3] %vm422, %v443
        %p445 = scmp.eq.s32.totalorder %s30, 1
        // Predicated region
        $region95: #{tpu_custom_call.1} parent=77 // pred_check
          %p446 = pneg %p445
        $region96: #{tpu_custom_call.1} parent=77 // pred_check_branch
          %448 = sbr.rel (%p446) target = $region98
        $region97: #{tpu_custom_call.1} parent=77 // pred_region
          %v449 = vld [vmem:[#allocation2] sm:$0xf]
          %v450 = vmul.f32 %v449, 0.0625
          %v451 = vld [vmem:[#allocation7] sm:$0xff]
          %v452 = vld [vmem:[#allocation7 + $0x8] sm:$0xff]
          %v453 = vld [vmem:[#allocation7 + $0x10] sm:$0xff]
          %v454 = vld [vmem:[#allocation7 + $0x18] sm:$0xff]
          %v455 = vld [vmem:[%s4] sm:$0xff]
          %v456 = vld [vmem:[%s4 + $0x8] sm:$0xff]
          %v457 = vld [vmem:[%s4 + $0x10] sm:$0xff]
          %v458 = vld [vmem:[%s4 + $0x18] sm:$0xff]
          %v460 = vsel %vm401, %v450, 0
          %462 = vmatprep.subr.mxu0 0.0
          %463 = vmatpush1.msra.mxu0 %v455
          %464 = vmatprep.subr.mxu0 0.0
          %465 = vmatpush1.msra.mxu0 %v456
          %466 = vmatprep.subr.mxu0 0.0
          %467 = vmatpush1.msra.mxu0 %v457
          %468 = vmatprep.subr.mxu0 0.0
          %469 = vmatpush1.msra.mxu0 %v458
          %470 = vmatprep.subr.mxu0 0.0
          %471 = vmatpush1.msra.mxu0 0.0
          %472 = vmatprep.subr.mxu0 0.0
          %473 = vmatpush1.msra.mxu0 0.0
          %474 = vmatprep.subr.mxu0 0.0
          %475 = vmatpush1.msra.mxu0 0.0
          %476 = vmatprep.subr.mxu0 0.0
          %477 = vmatpush1.msra.mxu0 0.0
          %478 = vmatprep.subr.mxu0 0.0
          %479 = vmatpush1.msra.mxu0 0.0
          %480 = vmatprep.subr.mxu0 0.0
          %481 = vmatpush1.msra.mxu0 0.0
          %482 = vmatprep.subr.mxu0 0.0
          %483 = vmatpush1.msra.mxu0 0.0
          %484 = vmatprep.subr.mxu0 0.0
          %485 = vmatpush1.msra.mxu0 0.0
          %486 = vmatprep.subr.mxu0 0.0
          %487 = vmatpush1.msra.mxu0 0.0
          %488 = vmatprep.subr.mxu0 0.0
          %489 = vmatpush1.msra.mxu0 0.0
          %490 = vmatprep.subr.mxu0 0.0
          %491 = vmatpush1.msra.mxu0 0.0
          %492 = vmatprep.subr.mxu0 0.0
          %493 = vmatpush1.msra.mxu0 0.0
          %494 = vmatprep.subr.mxu0 0.0
          %495 = vmatpush1.msra.mxu0 0.0
          %496 = vmatprep.subr.mxu0 0.0
          %497 = vmatpush1.msra.mxu0 0.0
          %498 = vmatprep.subr.mxu0 0.0
          %499 = vmatpush1.msra.mxu0 0.0
          %500 = vmatprep.subr.mxu0 0.0
          %501 = vmatpush1.msra.mxu0 0.0
          %502 = vmatprep.subr.mxu0 0.0
          %503 = vmatpush1.msra.mxu0 0.0
          %504 = vmatprep.subr.mxu0 0.0
          %505 = vmatpush1.msra.mxu0 0.0
          %506 = vmatprep.subr.mxu0 0.0
          %507 = vmatpush1.msra.mxu0 0.0
          %508 = vmatprep.subr.mxu0 0.0
          %509 = vmatpush1.msra.mxu0 0.0
          %510 = vmatprep.subr.mxu0 0.0
          %511 = vmatpush1.msra.mxu0 0.0
          %512 = vmatprep.subr.mxu0 0.0
          %513 = vmatpush1.msra.mxu0 0.0
          %514 = vmatprep.subr.mxu0 0.0
          %515 = vmatpush1.msra.mxu0 0.0
          %516 = vmatprep.subr.mxu0 0.0
          %517 = vmatpush1.msra.mxu0 0.0
          %518 = vmatprep.subr.mxu0 0.0
          %519 = vmatpush1.msra.mxu0 0.0
          %520 = vmatprep.subr.mxu0 0.0
          %521 = vmatpush1.msra.mxu0 0.0
          %522 = vmatprep.subr.mxu0 0.0
          %523 = vmatpush1.msra.mxu0 0.0
          %524 = vmatprep.subr.mxu0 0.0
          %525 = vmatpush1.msra.mxu0 0.0
          %526 = vmatprep.mubr.f32.mxu0 0.0
          %527 = vmatmul.mubr.f32.gmra.mrb[0].mxu0 %v460
          %v528 = vpop.f32.mrb[0].mxu0
          %v529 = vadd.f32 0.0, %v528
          %v530 = vpop.f32.mrb[0].mxu0
          %531 = vdwg.mxu0
          %v532 = vld [vmem:[%s5] sm:$0xf]
          %vm533 = vcmask 31744
          %v535 = vsel %vm533, %v529, 0
          %vm537 = vcmask 1043456
          %v539 = vsel %vm537, %v532, 0
          %541 = vmatprep.subr.mxu0 0.0
          %542 = vmatpush1.msra.mxu0 %v539
          %543 = vmatprep.subr.mxu0 0.0
          %544 = vmatpush1.msra.mxu0 0.0
          %545 = vmatprep.subr.mxu0 0.0
          %546 = vmatpush1.msra.mxu0 0.0
          %547 = vmatprep.subr.mxu0 0.0
          %548 = vmatpush1.msra.mxu0 0.0
          %549 = vmatprep.subr.mxu0 0.0
          %550 = vmatpush1.msra.mxu0 0.0
          %551 = vmatprep.subr.mxu0 0.0
          %552 = vmatpush1.msra.mxu0 0.0
          %553 = vmatprep.subr.mxu0 0.0
          %554 = vmatpush1.msra.mxu0 0.0
          %555 = vmatprep.subr.mxu0 0.0
          %556 = vmatpush1.msra.mxu0 0.0
          %557 = vmatprep.subr.mxu0 0.0
          %558 = vmatpush1.msra.mxu0 0.0
          %559 = vmatprep.subr.mxu0 0.0
          %560 = vmatpush1.msra.mxu0 0.0
          %561 = vmatprep.subr.mxu0 0.0
          %562 = vmatpush1.msra.mxu0 0.0
          %563 = vmatprep.subr.mxu0 0.0
          %564 = vmatpush1.msra.mxu0 0.0
          %565 = vmatprep.subr.mxu0 0.0
          %566 = vmatpush1.msra.mxu0 0.0
          %567 = vmatprep.subr.mxu0 0.0
          %568 = vmatpush1.msra.mxu0 0.0
          %569 = vmatprep.subr.mxu0 0.0
          %570 = vmatpush1.msra.mxu0 0.0
          %571 = vmatprep.subr.mxu0 0.0
          %572 = vmatpush1.msra.mxu0 0.0
          %573 = vmatprep.subr.mxu0 0.0
          %574 = vmatpush1.msra.mxu0 0.0
          %575 = vmatprep.subr.mxu0 0.0
          %576 = vmatpush1.msra.mxu0 0.0
          %577 = vmatprep.subr.mxu0 0.0
          %578 = vmatpush1.msra.mxu0 0.0
          %579 = vmatprep.subr.mxu0 0.0
          %580 = vmatpush1.msra.mxu0 0.0
          %581 = vmatprep.subr.mxu0 0.0
          %582 = vmatpush1.msra.mxu0 0.0
          %583 = vmatprep.subr.mxu0 0.0
          %584 = vmatpush1.msra.mxu0 0.0
          %585 = vmatprep.subr.mxu0 0.0
          %586 = vmatpush1.msra.mxu0 0.0
          %587 = vmatprep.subr.mxu0 0.0
          %588 = vmatpush1.msra.mxu0 0.0
          %589 = vmatprep.subr.mxu0 0.0
          %590 = vmatpush1.msra.mxu0 0.0
          %591 = vmatprep.subr.mxu0 0.0
          %592 = vmatpush1.msra.mxu0 0.0
          %593 = vmatprep.subr.mxu0 0.0
          %594 = vmatpush1.msra.mxu0 0.0
          %595 = vmatprep.subr.mxu0 0.0
          %596 = vmatpush1.msra.mxu0 0.0
          %597 = vmatprep.subr.mxu0 0.0
          %598 = vmatpush1.msra.mxu0 0.0
          %599 = vmatprep.subr.mxu0 0.0
          %600 = vmatpush1.msra.mxu0 0.0
          %601 = vmatprep.subr.mxu0 0.0
          %602 = vmatpush1.msra.mxu0 0.0
          %603 = vmatprep.subr.mxu0 0.0
          %604 = vmatpush1.msra.mxu0 0.0
          %605 = vmatprep.mubr.f32.mxu0 0.0
          %606 = vmatmul.mubr.f32.gmra.mrb[0].mxu0 %v535
          %v607 = vpop.f32.mrb[0].mxu0
          %v608 = vadd.f32 0.0, %v607
          %v609 = vpop.f32.mrb[0].mxu0
          %610 = vdwg.mxu0
          %611 = vmatprep.subr.mxu0 0.0
          %612 = vmatpush1.msra.mxu0 %v451
          %613 = vmatprep.subr.mxu0 0.0
          %614 = vmatpush1.msra.mxu0 %v452
          %615 = vmatprep.subr.mxu0 0.0
          %616 = vmatpush1.msra.mxu0 %v453
          %617 = vmatprep.subr.mxu0 0.0
          %618 = vmatpush1.msra.mxu0 %v454
          %619 = vmatprep.subr.mxu0 0.0
          %620 = vmatpush1.msra.mxu0 0.0
          %621 = vmatprep.subr.mxu0 0.0
          %622 = vmatpush1.msra.mxu0 0.0
          %623 = vmatprep.subr.mxu0 0.0
          %624 = vmatpush1.msra.mxu0 0.0
          %625 = vmatprep.subr.mxu0 0.0
          %626 = vmatpush1.msra.mxu0 0.0
          %627 = vmatprep.subr.mxu0 0.0
          %628 = vmatpush1.msra.mxu0 0.0
          %629 = vmatprep.subr.mxu0 0.0
          %630 = vmatpush1.msra.mxu0 0.0
          %631 = vmatprep.subr.mxu0 0.0
          %632 = vmatpush1.msra.mxu0 0.0
          %633 = vmatprep.subr.mxu0 0.0
          %634 = vmatpush1.msra.mxu0 0.0
          %635 = vmatprep.subr.mxu0 0.0
          %636 = vmatpush1.msra.mxu0 0.0
          %637 = vmatprep.subr.mxu0 0.0
          %638 = vmatpush1.msra.mxu0 0.0
          %639 = vmatprep.subr.mxu0 0.0
          %640 = vmatpush1.msra.mxu0 0.0
          %641 = vmatprep.subr.mxu0 0.0
          %642 = vmatpush1.msra.mxu0 0.0
          %643 = vmatprep.subr.mxu0 0.0
          %644 = vmatpush1.msra.mxu0 0.0
          %645 = vmatprep.subr.mxu0 0.0
          %646 = vmatpush1.msra.mxu0 0.0
          %647 = vmatprep.subr.mxu0 0.0
          %648 = vmatpush1.msra.mxu0 0.0
          %649 = vmatprep.subr.mxu0 0.0
          %650 = vmatpush1.msra.mxu0 0.0
          %651 = vmatprep.subr.mxu0 0.0
          %652 = vmatpush1.msra.mxu0 0.0
          %653 = vmatprep.subr.mxu0 0.0
          %654 = vmatpush1.msra.mxu0 0.0
          %655 = vmatprep.subr.mxu0 0.0
          %656 = vmatpush1.msra.mxu0 0.0
          %657 = vmatprep.subr.mxu0 0.0
          %658 = vmatpush1.msra.mxu0 0.0
          %659 = vmatprep.subr.mxu0 0.0
          %660 = vmatpush1.msra.mxu0 0.0
          %661 = vmatprep.subr.mxu0 0.0
          %662 = vmatpush1.msra.mxu0 0.0
          %663 = vmatprep.subr.mxu0 0.0
          %664 = vmatpush1.msra.mxu0 0.0
          %665 = vmatprep.subr.mxu0 0.0
          %666 = vmatpush1.msra.mxu0 0.0
          %667 = vmatprep.subr.mxu0 0.0
          %668 = vmatpush1.msra.mxu0 0.0
          %669 = vmatprep.subr.mxu0 0.0
          %670 = vmatpush1.msra.mxu0 0.0
          %671 = vmatprep.subr.mxu0 0.0
          %672 = vmatpush1.msra.mxu0 0.0
          %673 = vmatprep.subr.mxu0 0.0
          %674 = vmatpush1.msra.mxu0 0.0
          %675 = vmatprep.mubr.f32.mxu0 0.0
          %676 = vmatmul.mubr.f32.gmra.mrb[0].mxu0 %v460
          %v677 = vpop.f32.mrb[0].mxu0
          %v678 = vadd.f32 %v608, %v677
          %v679 = vpop.f32.mrb[0].mxu0
          %680 = vdwg.mxu0
          %v681 = vld [vmem:[%s3] sm:$0x1]
          %v683 = vlaneseq
          %v684 = vshrl.u32 %v683, 7
          %v685 = vsub.s32 0, %v684
          %v686 = vrot.slane %v681, %v685
          %v688 = vadd.f32 %v678, %v686
          %689 = vst.msk [vmem:[#allocation9] sm:$0x3] %vm422, %v688
          %vm690 = vcmask 257026
          %691 = vst.msk [vmem:[#allocation10 - $0x2] sm:$0xc] %vm690, %v688
        $region98: #{tpu_custom_call.1} parent=77 // pred_fallthru
          _
        // Predicated region
        $region99: #{tpu_custom_call.1} parent=77 // pred_check
          %p692 = pneg %p195
        $region100: #{tpu_custom_call.1} parent=77 // pred_check_branch
          %694 = sbr.rel (%p692) target = $region102
        $region101: #{tpu_custom_call.1} parent=77 // pred_region
          %s696 = ssub.s32 32, 32
          %697 = vsyncadd [#allocation6], %s696
          %s698 = smul.addr %s29, 32
          %s699 = scalar_lea.hbm %s6, %s698
          %s701 = sshll.u32 [#allocation9], 4
          %s702 = int_to_ptr.vmem [resolvable:$true] %s701
          %704 = dma.vmem_to_hbm [thread:$0]  %s702, 32, %s699, [#allocation6]
        $region102: #{tpu_custom_call.1} parent=77 // pred_fallthru
          _
        // Predicated region
        $region103: #{tpu_custom_call.1} parent=77 // pred_check
          %p705 = pneg %p221
        $region104: #{tpu_custom_call.1} parent=77 // pred_check_branch
          %707 = sbr.rel (%p705) target = $region106
        $region105: #{tpu_custom_call.1} parent=77 // pred_region
          %s709 = ssub.s32 32, 32
          %710 = vsyncadd [#allocation11], %s709
          %s711 = smul.addr %s29, 32
          %s712 = scalar_lea.hbm %s7, %s711
          %s714 = sshll.u32 [#allocation10], 4
          %s715 = int_to_ptr.vmem [resolvable:$true] %s714
          %717 = dma.vmem_to_hbm [thread:$0]  %s715, 32, %s712, [#allocation11]
        $region106: #{tpu_custom_call.1} parent=77 // pred_fallthru
          _
        // Predicated region
        $region107: #{tpu_custom_call.1} parent=77 // pred_check
          %p718 = pneg %p195
        $region108: #{tpu_custom_call.1} parent=77 // pred_check_branch
          %720 = sbr.rel (%p718) target = $region110
        $region109: #{tpu_custom_call.1} parent=77 // pred_region
          %721 = dma.done [#allocation6], 32
        $region110: #{tpu_custom_call.1} parent=77 // pred_fallthru
          _
        // Predicated region
        $region111: #{tpu_custom_call.1} parent=77 // pred_check
          %p722 = pneg %p221
        $region112: #{tpu_custom_call.1} parent=77 // pred_check_branch
          %724 = sbr.rel (%p722) target = $region114
        $region113: #{tpu_custom_call.1} parent=77 // pred_region
          %725 = dma.done [#allocation11], 32
        $region114: #{tpu_custom_call.1} parent=77 // pred_fallthru
          _
      $region78: #{tpu_custom_call.1} parent=5 // pred_fallthru
        _
      %p726 = scmp.le.s32.totalorder 2, %s20
      // Predicated region
      $region115: #{tpu_custom_call.1} parent=5 // pred_check
        %p727 = pneg %p726
      $region116: #{tpu_custom_call.1} parent=5 // pred_check_branch
        %729 = sbr.rel (%p727) target = $region118
      $region117: #{tpu_custom_call.1} parent=5 // pred_region
        %s730 = ssub.s32 %s20, 2
      $region118: #{tpu_custom_call.1} parent=5 // pred_fallthru
        _
    $region6: #{tpu_custom_call.1} parent=1 // loop_footer
      %s24 = sadd.s32 1, %s20
    $region7: #{tpu_custom_call.1} parent=1 // loop_footer_branch
      %19 = sbr.rel target = $region3
    $region8: #{tpu_custom_call.1} parent=1 // loop_exit
      _
    %731 = vsyncpa [#allocation5], 1
    %s732 = scalar_lea.sflag [#allocation5], 1
    %733 = vsyncpa %s732, 1
    %734 = vsyncpa [#allocation8], 1
    %735 = vsyncpa [#allocation6], 1
    %s736 = scalar_lea.sflag [#allocation6], 1
    %737 = vsyncpa %s736, 1
    %738 = vsyncpa [#allocation11], 1

// kernel: tpu_custom_call.1
$region0: #{tpu_custom_call.1}
  #allocation0 [shape = 'u32[]', space=smem, size = 0x4, offset = 0x4, fixed_abs, tag = 'smem constant byte address 0x4 - core index']
  #allocation1 [shape = 'u32[144,128]{1,0:T(1,128)}', space=vmem, size = 0x12000, scoped, tag = 'internal scratch']
  #allocation2 [shape = 'f32[4,32]{1,0:T(4,128)}', space=vmem, size = 0x800, scoped, tag = 'scratch operand']
  %s0 = inlined_call_operand.vmem [shape: f32[2,16,32], index: 0, kind: input, shape index: {}]
  %s1 = inlined_call_operand.hbm [shape: f32[2,16,32], index: 1, kind: input, shape index: {}]
  %s2 = inlined_call_operand.hbm [shape: f32[32,32], index: 2, kind: input, shape index: {}]
  %s3 = inlined_call_operand.vmem [shape: f32[1,32], index: 3, kind: input, shape index: {}]
  %s4 = inlined_call_operand.vmem [shape: f32[32,4], index: 4, kind: input, shape index: {}]
  %s5 = inlined_call_operand.vmem [shape: f32[4,32], index: 5, kind: input, shape index: {}]
  %s6 = inlined_call_operand.hbm [shape: f32[2,32], index: 6, kind: output, shape index: {0}]
  %s7 = inlined_call_operand.hbm [shape: f32[2,32], index: 7, kind: output, shape index: {1}]
  %8 = xla_tuple %s6, %s7
  %s9 = sld [smem:[#allocation0]]
  $region119: #{tpu_custom_call.1} parent=0
    _
  %s11 = ssub.s32 1, %s9
  %s12 = scalar_select 0, %s11, %s9
  $region1: #{tpu_custom_call.1} parent=0
    #allocation3 [shape = 'u8[16384]{0}', space=vmem, size = 0x4000, scoped, tag = 'input window, operand 0']
    #allocation4 [shape = 'u8[16384]{0}', space=vmem, size = 0x4000, scoped, tag = 'input window, operand 1']
    #allocation5 [shape = 's32[2]{0}', space=sflag, size = 0x8, scoped, tag = 'scoped memory for tpu_custom_call.1']
    #allocation6 [shape = 's32[2]{0}', space=sflag, size = 0x8, scoped, tag = 'scoped memory for tpu_custom_call.1']
    #allocation7 [shape = 'u8[16384]{0}', space=vmem, size = 0x4000, scoped, tag = 'input window, operand 2, single buffered']
    #allocation8 [shape = 's32[1]{0}', space=sflag, size = 0x4, scoped, tag = 'scoped memory for tpu_custom_call.1']
    #allocation9 [shape = 'u8[1024]{0}', space=vmem, size = 0x400, scoped, tag = 'output window, operand 0, single buffered']
    #allocation10 [shape = 'u8[1024]{0}', space=vmem, size = 0x400, scoped, tag = 'output window, operand 1, single buffered']
    #allocation11 [shape = 's32[1]{0}', space=sflag, size = 0x4, scoped, tag = 'scoped memory for tpu_custom_call.1']
    %13 = vsyncpa [#allocation5], 0
    %s14 = scalar_lea.sflag [#allocation5], 1
    %15 = vsyncpa %s14, 0
    %16 = vsyncpa [#allocation8], 0
    %17 = vsyncpa [#allocation6], 0
    %18 = vsyncpa [#allocation11], 0
    loop: start=0, step=1, limit=4
    $region2: #{tpu_custom_call.1} parent=1 // loop_pre_header
      _
    $region3: #{tpu_custom_call.1} parent=1 // loop_header
      %s20 = sphi 0, %s24
      %p21 = scmp.ge.s32.totalorder %s20, 4
      %s27 = sphi 0, %s39
      %s28 = sphi 0, %s35
      %s29 = sphi 0, %s27
      %s30 = sphi 0, %s28
      %s31 = sphi 0, %s29
      %s32 = sphi 0, %s30
      %s44 = sphi 0, %s46
      %s47 = sphi 0, %s44
      %s48 = sphi 0, %s47
      %s64 = sphi 0, %s48
      %s72 = sphi 0, %s74
      %s75 = sphi 0, %s72
      %s76 = sphi 0, %s75
      %s92 = sphi 0, %s76
      %s96 = sphi 0, %s96
      %s98 = sphi 0, %s96
      %s99 = sphi 0, %s98
      %s113 = sphi 0, %s99
      %s117 = sphi 0, %s117
      %s119 = sphi 0, %s117
      %s120 = sphi 0, %s119
      %s134 = sphi 0, %s120
      %s138 = sphi 0, %s138
      %s140 = sphi 0, %s138
      %s141 = sphi 0, %s140
      %s155 = sphi 0, %s141
      %s159 = sphi 0, %s159
      %s161 = sphi 0, %s159
      %s162 = sphi 0, %s161
      %s176 = sphi 0, %s162
      %s182 = sphi 0, %s184
      %s185 = sphi 0, %s182
      %s186 = sphi 0, %s185
      %s202 = sphi 0, %s186
      %s208 = sphi 0, %s210
      %s211 = sphi 0, %s208
      %s212 = sphi 0, %s211
      %s228 = sphi 0, %s212
    $region4: #{tpu_custom_call.1} parent=1 // loop_header_branch
      %23 = sbr.rel (%p21) target = $region8
    $region5: #{tpu_custom_call.1} parent=1 // loop_body
      %s25 = ssub.s32 %s20, 1
      %s26 = ssub.s32 %s20, 2
      %s33 = sadd.s32 1, %s28
      %p34 = scmp.ge.s32.totalorder %s33, 2
      %s35 = scalar_select %p34, 0, %s33
      %s36 = sadd.s32 1, %s27
      %s37 = scalar_select %p34, %s36, %s27
      %p38 = scmp.ge.s32.totalorder %s37, 1
      %s39 = scalar_select %p38, 0, %s37
      %s40 = ssub.s32 %s27, %s39
      %s41 = ssub.s32 %s28, %s35
      %s42 = sor.u32 %s40, %s41
      %p43 = scmp.eq.s32.totalorder %s42, 0
      %s45 = sadd.s32 %s44, 1
      %s46 = scalar_select %p43, %s44, %s45
      %p49 = pneg %p43
      %p50 = scmp.eq.s32.totalorder %s20, 1
      %p51 = por %p49, %p50
      %p52 = scmp.ne.s32.totalorder %s44, %s47
      %p53 = scmp.eq.s32.totalorder %s20, 0
      %p54 = por %p52, %p53
      %p55 = scmp.ne.s32.totalorder %s44, %s47
      %p56 = scmp.eq.s32.totalorder %s25, 1
      %p57 = por %p55, %p56
      %p58 = scmp.ne.s32.totalorder %s47, %s48
      %p59 = scmp.eq.s32.totalorder %s25, 0
      %p60 = por %p58, %p59
      %p61 = scmp.ne.s32.totalorder %s47, %s48
      %p62 = scmp.eq.s32.totalorder %s26, 1
      %p63 = por %p61, %p62
      %p65 = scmp.ne.s32.totalorder %s48, %s64
      %p66 = scmp.eq.s32.totalorder %s26, 0
      %p67 = por %p65, %p66
      %s68 = ssub.s32 %s27, %s39
      %s69 = ssub.s32 %s28, %s35
      %s70 = sor.u32 %s68, %s69
      %p71 = scmp.eq.s32.totalorder %s70, 0
      %s73 = sadd.s32 %s72, 1
      %s74 = scalar_select %p71, %s72, %s73
      %p77 = pneg %p71
      %p78 = scmp.eq.s32.totalorder %s20, 1
      %p79 = por %p77, %p78
      %p80 = scmp.ne.s32.totalorder %s72, %s75
      %p81 = scmp.eq.s32.totalorder %s20, 0
      %p82 = por %p80, %p81
      %p83 = scmp.ne.s32.totalorder %s72, %s75
      %p84 = scmp.eq.s32.totalorder %s25, 1
      %p85 = por %p83, %p84
      %p86 = scmp.ne.s32.totalorder %s75, %s76
      %p87 = scmp.eq.s32.totalorder %s25, 0
      %p88 = por %p86, %p87
      %p89 = scmp.ne.s32.totalorder %s75, %s76
      %p90 = scmp.eq.s32.totalorder %s26, 1
      %p91 = por %p89, %p90
      %p93 = scmp.ne.s32.totalorder %s76, %s92
      %p94 = scmp.eq.s32.totalorder %s26, 0
      %p95 = por %p93, %p94
      %s97 = sadd.s32 %s96, 1
      %p100 = scmp.eq.s32.totalorder %s20, 1
      %p101 = scmp.ne.s32.totalorder %s96, %s98
      %p102 = scmp.eq.s32.totalorder %s20, 0
      %p103 = por %p101, %p102
      %p104 = scmp.ne.s32.totalorder %s96, %s98
      %p105 = scmp.eq.s32.totalorder %s25, 1
      %p106 = por %p104, %p105
      %p107 = scmp.ne.s32.totalorder %s98, %s99
      %p108 = scmp.eq.s32.totalorder %s25, 0
      %p109 = por %p107, %p108
      %p110 = scmp.ne.s32.totalorder %s98, %s99
      %p111 = scmp.eq.s32.totalorder %s26, 1
      %p112 = por %p110, %p111
      %p114 = scmp.ne.s32.totalorder %s99, %s113
      %p115 = scmp.eq.s32.totalorder %s26, 0
      %p116 = por %p114, %p115
      %s118 = sadd.s32 %s117, 1
      %p121 = scmp.eq.s32.totalorder %s20, 1
      %p122 = scmp.ne.s32.totalorder %s117, %s119
      %p123 = scmp.eq.s32.totalorder %s20, 0
      %p124 = por %p122, %p123
      %p125 = scmp.ne.s32.totalorder %s117, %s119
      %p126 = scmp.eq.s32.totalorder %s25, 1
      %p127 = por %p125, %p126
      %p128 = scmp.ne.s32.totalorder %s119, %s120
      %p129 = scmp.eq.s32.totalorder %s25, 0
      %p130 = por %p128, %p129
      %p131 = scmp.ne.s32.totalorder %s119, %s120
      %p132 = scmp.eq.s32.totalorder %s26, 1
      %p133 = por %p131, %p132
      %p135 = scmp.ne.s32.totalorder %s120, %s134
      %p136 = scmp.eq.s32.totalorder %s26, 0
      %p137 = por %p135, %p136
      %s139 = sadd.s32 %s138, 1
      %p142 = scmp.eq.s32.totalorder %s20, 1
      %p143 = scmp.ne.s32.totalorder %s138, %s140
      %p144 = scmp.eq.s32.totalorder %s20, 0
      %p145 = por %p143, %p144
      %p146 = scmp.ne.s32.totalorder %s138, %s140
      %p147 = scmp.eq.s32.totalorder %s25, 1
      %p148 = por %p146, %p147
      %p149 = scmp.ne.s32.totalorder %s140, %s141
      %p150 = scmp.eq.s32.totalorder %s25, 0
      %p151 = por %p149, %p150
      %p152 = scmp.ne.s32.totalorder %s140, %s141
      %p153 = scmp.eq.s32.totalorder %s26, 1
      %p154 = por %p152, %p153
      %p156 = scmp.ne.s32.totalorder %s141, %s155
      %p157 = scmp.eq.s32.totalorder %s26, 0
      %p158 = por %p156, %p157
      %s160 = sadd.s32 %s159, 1
      %p163 = scmp.eq.s32.totalorder %s20, 1
      %p164 = scmp.ne.s32.totalorder %s159, %s161
      %p165 = scmp.eq.s32.totalorder %s20, 0
      %p166 = por %p164, %p165
      %p167 = scmp.ne.s32.totalorder %s159, %s161
      %p168 = scmp.eq.s32.totalorder %s25, 1
      %p169 = por %p167, %p168
      %p170 = scmp.ne.s32.totalorder %s161, %s162
      %p171 = scmp.eq.s32.totalorder %s25, 0
      %p172 = por %p170, %p171
      %p173 = scmp.ne.s32.totalorder %s161, %s162
      %p174 = scmp.eq.s32.totalorder %s26, 1
      %p175 = por %p173, %p174
      %p177 = scmp.ne.s32.totalorder %s162, %s176
      %p178 = scmp.eq.s32.totalorder %s26, 0
      %p179 = por %p177, %p178
      %s180 = ssub.s32 %s27, %s39
      %p181 = scmp.eq.s32.totalorder %s180, 0
      %s183 = sadd.s32 %s182, 1
      %s184 = scalar_select %p181, %s182, %s183
      %p187 = pneg %p181
      %p188 = scmp.eq.s32.totalorder %s20, 1
      %p189 = por %p187, %p188
      %p190 = scmp.ne.s32.totalorder %s182, %s185
      %p191 = scmp.eq.s32.totalorder %s20, 0
      %p192 = por %p190, %p191
      %p193 = scmp.ne.s32.totalorder %s182, %s185
      %p194 = scmp.eq.s32.totalorder %s25, 1
      %p195 = por %p193, %p194
      %p196 = scmp.ne.s32.totalorder %s185, %s186
      %p197 = scmp.eq.s32.totalorder %s25, 0
      %p198 = por %p196, %p197
      %p199 = scmp.ne.s32.totalorder %s185, %s186
      %p200 = scmp.eq.s32.totalorder %s26, 1
      %p201 = por %p199, %p200
      %p203 = scmp.ne.s32.totalorder %s186, %s202
      %p204 = scmp.eq.s32.totalorder %s26, 0
      %p205 = por %p203, %p204
      %s206 = ssub.s32 %s27, %s39
      %p207 = scmp.eq.s32.totalorder %s206, 0
      %s209 = sadd.s32 %s208, 1
      %s210 = scalar_select %p207, %s208, %s209
      %p213 = pneg %p207
      %p214 = scmp.eq.s32.totalorder %s20, 1
      %p215 = por %p213, %p214
      %p216 = scmp.ne.s32.totalorder %s208, %s211
      %p217 = scmp.eq.s32.totalorder %s20, 0
      %p218 = por %p216, %p217
      %p219 = scmp.ne.s32.totalorder %s208, %s211
      %p220 = scmp.eq.s32.totalorder %s25, 1
      %p221 = por %p219, %p220
      %p222 = scmp.ne.s32.totalorder %s211, %s212
      %p223 = scmp.eq.s32.totalorder %s25, 0
      %p224 = por %p222, %p223
      %p225 = scmp.ne.s32.totalorder %s211, %s212
      %p226 = scmp.eq.s32.totalorder %s26, 1
      %p227 = por %p225, %p226
      %p229 = scmp.ne.s32.totalorder %s212, %s228
      %p230 = scmp.eq.s32.totalorder %s26, 0
      %p231 = por %p229, %p230
      %p232 = scmp.le.s32.totalorder 1, %s20
      %p233 = scmp.lt.s32.totalorder %s20, 3
      %p234 = pnand %p232, %p233
      %p235 = pneg %p234
      // Predicated region
      $region9: #{tpu_custom_call.1} parent=5 // pred_check
        _
      $region10: #{tpu_custom_call.1} parent=5 // pred_check_branch
        %237 = sbr.rel (%p234) target = $region12
      $region11: #{tpu_custom_call.1} parent=5 // pred_region
        %s238 = ssub.s32 %s20, 1
        // Predicated region
        $region13: #{tpu_custom_call.1} parent=11 // pred_check
          %p239 = pneg %p109
        $region14: #{tpu_custom_call.1} parent=11 // pred_check_branch
          %241 = sbr.rel (%p239) target = $region16
        $region15: #{tpu_custom_call.1} parent=11 // pred_region
          %s243 = ssub.s32 512, 512
          %244 = vsyncadd [#allocation8], %s243
          %s245 = sshll.u32 [#allocation7], 4
          %s246 = int_to_ptr.vmem [resolvable:$true] %s245
          %251 = dma.hbm_to_vmem [thread:$0]  %s2, 512, %s246, [#allocation8], 128, 128, 8
        $region16: #{tpu_custom_call.1} parent=11 // pred_fallthru
          _
        // Predicated region
        $region17: #{tpu_custom_call.1} parent=11 // pred_check
          %p252 = pneg %p130
        $region18: #{tpu_custom_call.1} parent=11 // pred_check_branch
          %254 = sbr.rel (%p252) target = $region20
        $region19: #{tpu_custom_call.1} parent=11 // pred_region
          _
        $region20: #{tpu_custom_call.1} parent=11 // pred_fallthru
          _
        // Predicated region
        $region21: #{tpu_custom_call.1} parent=11 // pred_check
          %p255 = pneg %p151
        $region22: #{tpu_custom_call.1} parent=11 // pred_check_branch
          %257 = sbr.rel (%p255) target = $region24
        $region23: #{tpu_custom_call.1} parent=11 // pred_region
          _
        $region24: #{tpu_custom_call.1} parent=11 // pred_fallthru
          _
        // Predicated region
        $region25: #{tpu_custom_call.1} parent=11 // pred_check
          %p258 = pneg %p172
        $region26: #{tpu_custom_call.1} parent=11 // pred_check_branch
          %260 = sbr.rel (%p258) target = $region28
        $region27: #{tpu_custom_call.1} parent=11 // pred_region
          _
        $region28: #{tpu_custom_call.1} parent=11 // pred_fallthru
          _
      $region12: #{tpu_custom_call.1} parent=5 // pred_fallthru
        _
      %p261 = scmp.lt.s32.totalorder %s20, 2
      // Predicated region
      $region29: #{tpu_custom_call.1} parent=5 // pred_check
        %p262 = pneg %p261
      $region30: #{tpu_custom_call.1} parent=5 // pred_check_branch
        %264 = sbr.rel (%p262) target = $region32
      $region31: #{tpu_custom_call.1} parent=5 // pred_region
        // Predicated region
        $region33: #{tpu_custom_call.1} parent=31 // pred_check
          %p265 = pneg %p54
        $region34: #{tpu_custom_call.1} parent=31 // pred_check_branch
          %267 = sbr.rel (%p265) target = $region36
        $region35: #{tpu_custom_call.1} parent=31 // pred_region
          %s268 = sand.u32 %s44, 1
          %s269 = sand.u32 %s44, 1
          %s270 = smul.addr %s269, 16
          %s271 = scalar_lea.vmem [#allocation3], %s270
          %s272 = smul.u32 2, %s27
          %s273 = smul.addr %s272, 2
          %s274 = sadd.s32 %s28, %s273
          %s275 = smul.addr %s274, 8
          %s276 = scalar_lea.vmem %s0, %s275
          // Predicated region
          $region37: #{tpu_custom_call.1} parent=35 // pred_check
            _
          $region38: #{tpu_custom_call.1} parent=35 // pred_check_branch
            %278 = sbr.rel (0) target = $region40
          $region39: #{tpu_custom_call.1} parent=35 // pred_region
            // Predicated region
            $region41: #{tpu_custom_call.1} parent=39 // pred_check
              _
            $region42: #{tpu_custom_call.1} parent=39 // pred_check_branch
              %280 = sbr.rel (0) target = $region44
            $region43: #{tpu_custom_call.1} parent=39 // pred_region
              // Predicated region
              $region56: #{tpu_custom_call.1} parent=43 // pred_check
                _
              $region57: #{tpu_custom_call.1} parent=43 // pred_check_branch
                %297 = sbr.rel (0) target = $region59
              $region58: #{tpu_custom_call.1} parent=43 // pred_region
                loop: start=0, step=1, limit=1
                $region60: #{tpu_custom_call.1} parent=58 // loop_pre_header
                  _
                $region61: #{tpu_custom_call.1} parent=58 // loop_header
                  %s299 = sphi 0, %s303
                  %p300 = scmp.ge.s32.totalorder %s299, 1
                  %s304 = sphi %s276, %s276
                  %s305 = sphi %s271, %s271
                $region62: #{tpu_custom_call.1} parent=58 // loop_header_branch
                  %302 = sbr.rel (%p300) target = $region66
                $region63: #{tpu_custom_call.1} parent=58 // loop_body
                  %v306 = vld [vmem:[%s304] sm:$0xff]
                  %307 = vst [vmem:[%s305] sm:$0xff] %v306
                  %v308 = vld [vmem:[%s304 + $0x10] sm:$0xff]
                  %309 = vst [vmem:[%s305 + $0x8] sm:$0xff] %v308
                $region64: #{tpu_custom_call.1} parent=58 // loop_footer
                  %s303 = sadd.s32 1, %s299
                $region65: #{tpu_custom_call.1} parent=58 // loop_footer_branch
                  %298 = sbr.rel target = $region61
                $region66: #{tpu_custom_call.1} parent=58 // loop_exit
                  _
              $region59: #{tpu_custom_call.1} parent=43 // pred_fallthru
                _
              // Predicated region
              $region67: #{tpu_custom_call.1} parent=43 // pred_check
                _
              $region68: #{tpu_custom_call.1} parent=43 // pred_check_branch
                %311 = sbr.rel target = $region70
              $region69: #{tpu_custom_call.1} parent=43 // pred_region
                _
              $region70: #{tpu_custom_call.1} parent=43 // pred_fallthru
                _
            $region44: #{tpu_custom_call.1} parent=39 // pred_fallthru
              _
            // Predicated region
            $region45: #{tpu_custom_call.1} parent=39 // pred_check
              _
            $region46: #{tpu_custom_call.1} parent=39 // pred_check_branch
              %282 = sbr.rel target = $region48
            $region47: #{tpu_custom_call.1} parent=39 // pred_region
              loop: start=0, step=1, limit=1
              $region49: #{tpu_custom_call.1} parent=47 // loop_pre_header
                _
              $region50: #{tpu_custom_call.1} parent=47 // loop_header
                %s285 = sphi 0, %s289
                %p286 = scmp.ge.s32.totalorder %s285, 1
                %s290 = sphi %s276, %s276
                %s291 = sphi %s271, %s271
              $region51: #{tpu_custom_call.1} parent=47 // loop_header_branch
                %288 = sbr.rel (%p286) target = $region55
              $region52: #{tpu_custom_call.1} parent=47 // loop_body
                %v292 = vld [vmem:[%s290] sm:$0xff]
                %293 = vst [vmem:[%s291] sm:$0xff] %v292
                %v294 = vld [vmem:[%s290 + $0x10] sm:$0xff]
                %295 = vst [vmem:[%s291 + $0x8] sm:$0xff] %v294
              $region53: #{tpu_custom_call.1} parent=47 // loop_footer
                %s289 = sadd.s32 1, %s285
              $region54: #{tpu_custom_call.1} parent=47 // loop_footer_branch
                %284 = sbr.rel target = $region50
              $region55: #{tpu_custom_call.1} parent=47 // loop_exit
                _
            $region48: #{tpu_custom_call.1} parent=39 // pred_fallthru
              _
          $region40: #{tpu_custom_call.1} parent=35 // pred_fallthru
            _
          %312 = vnop
        $region36: #{tpu_custom_call.1} parent=31 // pred_fallthru
          _
        // Predicated region
        $region71: #{tpu_custom_call.1} parent=31 // pred_check
          %p313 = pneg %p82
        $region72: #{tpu_custom_call.1} parent=31 // pred_check_branch
          %315 = sbr.rel (%p313) target = $region74
        $region73: #{tpu_custom_call.1} parent=31 // pred_region
          %s316 = sand.u32 %s72, 1
          %s317 = scalar_lea.sflag [#allocation5], %s316
          %s318 = sand.u32 %s72, 1
          %s319 = smul.addr %s318, 16
          %s320 = scalar_lea.vmem [#allocation4], %s319
          %s321 = smul.u32 2, %s27
          %s323 = ssub.s32 256, 256
          %324 = vsyncadd %s317, %s323
          %s325 = smul.addr %s321, 2
          %s326 = sadd.s32 %s28, %s325
          %s327 = smul.addr %s326, 128
          %s328 = scalar_lea.hbm %s1, %s327
          %s329 = sshll.u32 %s320, 4
          %s330 = int_to_ptr.vmem [resolvable:$true] %s329
          %335 = dma.hbm_to_vmem [thread:$0]  %s328, 256, %s330, %s317, 256, 128, 8
        $region74: #{tpu_custom_call.1} parent=31 // pred_fallthru
          _
      $region32: #{tpu_custom_call.1} parent=5 // pred_fallthru
        _
      %p336 = scmp.le.s32.totalorder 1, %s20
      %p337 = scmp.lt.s32.totalorder %s20, 3
      %p338 = pnand %p336, %p337
      %p339 = pneg %p338
      // Predicated region
      $region75: #{tpu_custom_call.1} parent=5 // pred_check
        _
      $region76: #{tpu_custom_call.1} parent=5 // pred_check_branch
        %341 = sbr.rel (%p338) target = $region78
      $region77: #{tpu_custom_call.1} parent=5 // pred_region
        %s342 = ssub.s32 %s20, 1
        %s343 = sand.u32 %s47, 1
        %s344 = sand.u32 %s47, 1
        %s345 = smul.addr %s344, 16
        %s346 = scalar_lea.vmem [#allocation3], %s345
        // Predicated region
        $region79: #{tpu_custom_call.1} parent=77 // pred_check
          %p347 = pneg %p60
        $region80: #{tpu_custom_call.1} parent=77 // pred_check_branch
          %349 = sbr.rel (%p347) target = $region82
        $region81: #{tpu_custom_call.1} parent=77 // pred_region
          _
        $region82: #{tpu_custom_call.1} parent=77 // pred_fallthru
          _
        %s350 = sand.u32 %s75, 1
        %s351 = scalar_lea.sflag [#allocation5], %s350
        %s352 = sand.u32 %s75, 1
        %s353 = smul.addr %s352, 16
        %s354 = scalar_lea.vmem [#allocation4], %s353
        // Predicated region
        $region83: #{tpu_custom_call.1} parent=77 // pred_check
          %p355 = pneg %p88
        $region84: #{tpu_custom_call.1} parent=77 // pred_check_branch
          %357 = sbr.rel (%p355) target = $region86
        $region85: #{tpu_custom_call.1} parent=77 // pred_region
          %358 = dma.done %s351, 256
        $region86: #{tpu_custom_call.1} parent=77 // pred_fallthru
          _
        // Predicated region
        $region87: #{tpu_custom_call.1} parent=77 // pred_check
          %p359 = pneg %p109
        $region88: #{tpu_custom_call.1} parent=77 // pred_check_branch
          %361 = sbr.rel (%p359) target = $region90
        $region89: #{tpu_custom_call.1} parent=77 // pred_region
          %362 = dma.done [#allocation8], 512
        $region90: #{tpu_custom_call.1} parent=77 // pred_fallthru
          _
        %s363 = sand.u32 %s47, 1
        %s364 = sand.u32 %s47, 1
        %s365 = smul.addr %s364, 16
        %s366 = scalar_lea.vmem [#allocation3], %s365
        %p367 = pneg %p60
        %p368 = pneg %p57
        %s369 = sand.u32 %s75, 1
        %s370 = scalar_lea.sflag [#allocation5], %s369
        %s371 = sand.u32 %s75, 1
        %s372 = smul.addr %s371, 16
        %s373 = scalar_lea.vmem [#allocation4], %s372
        %p374 = pneg %p88
        %p375 = pneg %p85
        %p376 = pneg %p109
        %p377 = pneg %p106
        %p378 = pneg %p130
        %p379 = pneg %p127
        %p380 = pneg %p151
        %p381 = pneg %p148
        %p382 = pneg %p172
        %p383 = pneg %p169
        %p384 = pneg %p198
        %p385 = pneg %p195
        %p386 = pneg %p224
        %p387 = pneg %p221
        %s388 = smul.u32 2, %s29
        %s389 = smul.u32 2, %s29
        %p390 = scmp.eq.s32.totalorder %s30, 0
        // Predicated region
        $region91: #{tpu_custom_call.1} parent=77 // pred_check
          %p391 = pneg %p390
        $region92: #{tpu_custom_call.1} parent=77 // pred_check_branch
          %393 = sbr.rel (%p391) target = $region94
        $region93: #{tpu_custom_call.1} parent=77 // pred_region
          %vm394 = vcmask 257024
          %395 = vst.msk [vmem:[#allocation2] sm:$0xf] %vm394, 0.0
        $region94: #{tpu_custom_call.1} parent=77 // pred_fallthru
          _
        %v396 = vld [vmem:[%s346] sm:$0xff]
        %v397 = vld [vmem:[%s346 + $0x8] sm:$0xff]
        %v398 = vld [vmem:[%s354] sm:$0xff]
        %v399 = vld [vmem:[%s354 + $0x8] sm:$0xff]
        %v400 = vld [vmem:[#allocation2] sm:$0x3]
        %vm401 = vcmask 261120
        %v402 = vsel %vm401, %v396, 0.0
        %v403 = vrot.slane %v402, 4
        %v404 = vadd.f32 %v402, %v403
        %v405 = vrot.slane %v404, 2
        %v406 = vadd.f32 %v404, %v405
        %v407 = vrot.slane %v406, 1
        %v408 = vadd.f32 %v406, %v407
        %v409 = vsel %vm401, %v397, 0.0
        %v410 = vrot.slane %v409, 4
        %v411 = vadd.f32 %v409, %v410
        %v412 = vrot.slane %v411, 2
        %v413 = vadd.f32 %v411, %v412
        %v414 = vrot.slane %v413, 1
        %v415 = vadd.f32 %v413, %v414
        %vm418 = vcmask 1041409
        %v419 = vsel %vm418, %v415, %v408
        %v421 = vadd.f32 %v400, %v419
        %vm422 = vcmask 254976
        %423 = vst.msk [vmem:[#allocation2] sm:$0x3] %vm422, %v421
        %v424 = vld [vmem:[#allocation2 + $0x2] sm:$0x3]
        %v425 = vsel %vm401, %v398, 0.0
        %v426 = vrot.slane %v425, 4
        %v427 = vadd.f32 %v425, %v426
        %v428 = vrot.slane %v427, 2
        %v429 = vadd.f32 %v427, %v428
        %v430 = vrot.slane %v429, 1
        %v431 = vadd.f32 %v429, %v430
        %v432 = vsel %vm401, %v399, 0.0
        %v433 = vrot.slane %v432, 4
        %v434 = vadd.f32 %v432, %v433
        %v435 = vrot.slane %v434, 2
        %v436 = vadd.f32 %v434, %v435
        %v437 = vrot.slane %v436, 1
        %v438 = vadd.f32 %v436, %v437
        %v441 = vsel %vm418, %v438, %v431
        %v443 = vadd.f32 %v424, %v441
        %444 = vst.msk [vmem:[#allocation2 + $0x2] sm:$0x3] %vm422, %v443
        %p445 = scmp.eq.s32.totalorder %s30, 1
        // Predicated region
        $region95: #{tpu_custom_call.1} parent=77 // pred_check
          %p446 = pneg %p445
        $region96: #{tpu_custom_call.1} parent=77 // pred_check_branch
          %448 = sbr.rel (%p446) target = $region98
        $region97: #{tpu_custom_call.1} parent=77 // pred_region
          %v449 = vld [vmem:[#allocation2] sm:$0xf]
          %v450 = vmul.f32 %v449, 0.0625
          %v451 = vld [vmem:[#allocation7] sm:$0xff]
          %v452 = vld [vmem:[#allocation7 + $0x8] sm:$0xff]
          %v453 = vld [vmem:[#allocation7 + $0x10] sm:$0xff]
          %v454 = vld [vmem:[#allocation7 + $0x18] sm:$0xff]
          %v455 = vld [vmem:[%s4] sm:$0xff]
          %v456 = vld [vmem:[%s4 + $0x8] sm:$0xff]
          %v457 = vld [vmem:[%s4 + $0x10] sm:$0xff]
          %v458 = vld [vmem:[%s4 + $0x18] sm:$0xff]
          %v460 = vsel %vm401, %v450, 0
          %462 = vmatprep.subr.mxu0 0.0
          %463 = vmatpush1.msra.mxu0 %v455
          %464 = vmatprep.subr.mxu0 0.0
          %465 = vmatpush1.msra.mxu0 %v456
          %466 = vmatprep.subr.mxu0 0.0
          %467 = vmatpush1.msra.mxu0 %v457
          %468 = vmatprep.subr.mxu0 0.0
          %469 = vmatpush1.msra.mxu0 %v458
          %470 = vmatprep.subr.mxu0 0.0
          %471 = vmatpush1.msra.mxu0 0.0
          %472 = vmatprep.subr.mxu0 0.0
          %473 = vmatpush1.msra.mxu0 0.0
          %474 = vmatprep.subr.mxu0 0.0
          %475 = vmatpush1.msra.mxu0 0.0
          %476 = vmatprep.subr.mxu0 0.0
          %477 = vmatpush1.msra.mxu0 0.0
          %478 = vmatprep.subr.mxu0 0.0
          %479 = vmatpush1.msra.mxu0 0.0
          %480 = vmatprep.subr.mxu0 0.0
          %481 = vmatpush1.msra.mxu0 0.0
          %482 = vmatprep.subr.mxu0 0.0
          %483 = vmatpush1.msra.mxu0 0.0
          %484 = vmatprep.subr.mxu0 0.0
          %485 = vmatpush1.msra.mxu0 0.0
          %486 = vmatprep.subr.mxu0 0.0
          %487 = vmatpush1.msra.mxu0 0.0
          %488 = vmatprep.subr.mxu0 0.0
          %489 = vmatpush1.msra.mxu0 0.0
          %490 = vmatprep.subr.mxu0 0.0
          %491 = vmatpush1.msra.mxu0 0.0
          %492 = vmatprep.subr.mxu0 0.0
          %493 = vmatpush1.msra.mxu0 0.0
          %494 = vmatprep.subr.mxu0 0.0
          %495 = vmatpush1.msra.mxu0 0.0
          %496 = vmatprep.subr.mxu0 0.0
          %497 = vmatpush1.msra.mxu0 0.0
          %498 = vmatprep.subr.mxu0 0.0
          %499 = vmatpush1.msra.mxu0 0.0
          %500 = vmatprep.subr.mxu0 0.0
          %501 = vmatpush1.msra.mxu0 0.0
          %502 = vmatprep.subr.mxu0 0.0
          %503 = vmatpush1.msra.mxu0 0.0
          %504 = vmatprep.subr.mxu0 0.0
          %505 = vmatpush1.msra.mxu0 0.0
          %506 = vmatprep.subr.mxu0 0.0
          %507 = vmatpush1.msra.mxu0 0.0
          %508 = vmatprep.subr.mxu0 0.0
          %509 = vmatpush1.msra.mxu0 0.0
          %510 = vmatprep.subr.mxu0 0.0
          %511 = vmatpush1.msra.mxu0 0.0
          %512 = vmatprep.subr.mxu0 0.0
          %513 = vmatpush1.msra.mxu0 0.0
          %514 = vmatprep.subr.mxu0 0.0
          %515 = vmatpush1.msra.mxu0 0.0
          %516 = vmatprep.subr.mxu0 0.0
          %517 = vmatpush1.msra.mxu0 0.0
          %518 = vmatprep.subr.mxu0 0.0
          %519 = vmatpush1.msra.mxu0 0.0
          %520 = vmatprep.subr.mxu0 0.0
          %521 = vmatpush1.msra.mxu0 0.0
          %522 = vmatprep.subr.mxu0 0.0
          %523 = vmatpush1.msra.mxu0 0.0
          %524 = vmatprep.subr.mxu0 0.0
          %525 = vmatpush1.msra.mxu0 0.0
          %526 = vmatprep.mubr.f32.mxu0 0.0
          %527 = vmatmul.mubr.f32.gmra.mrb[0].mxu0 %v460
          %v528 = vpop.f32.mrb[0].mxu0
          %v529 = vadd.f32 0.0, %v528
          %v530 = vpop.f32.mrb[0].mxu0
          %531 = vdwg.mxu0
          %v532 = vld [vmem:[%s5] sm:$0xf]
          %vm533 = vcmask 31744
          %v535 = vsel %vm533, %v529, 0
          %vm537 = vcmask 1043456
          %v539 = vsel %vm537, %v532, 0
          %541 = vmatprep.subr.mxu0 0.0
          %542 = vmatpush1.msra.mxu0 %v539
          %543 = vmatprep.subr.mxu0 0.0
          %544 = vmatpush1.msra.mxu0 0.0
          %545 = vmatprep.subr.mxu0 0.0
          %546 = vmatpush1.msra.mxu0 0.0
          %547 = vmatprep.subr.mxu0 0.0
          %548 = vmatpush1.msra.mxu0 0.0
          %549 = vmatprep.subr.mxu0 0.0
          %550 = vmatpush1.msra.mxu0 0.0
          %551 = vmatprep.subr.mxu0 0.0
          %552 = vmatpush1.msra.mxu0 0.0
          %553 = vmatprep.subr.mxu0 0.0
          %554 = vmatpush1.msra.mxu0 0.0
          %555 = vmatprep.subr.mxu0 0.0
          %556 = vmatpush1.msra.mxu0 0.0
          %557 = vmatprep.subr.mxu0 0.0
          %558 = vmatpush1.msra.mxu0 0.0
          %559 = vmatprep.subr.mxu0 0.0
          %560 = vmatpush1.msra.mxu0 0.0
          %561 = vmatprep.subr.mxu0 0.0
          %562 = vmatpush1.msra.mxu0 0.0
          %563 = vmatprep.subr.mxu0 0.0
          %564 = vmatpush1.msra.mxu0 0.0
          %565 = vmatprep.subr.mxu0 0.0
          %566 = vmatpush1.msra.mxu0 0.0
          %567 = vmatprep.subr.mxu0 0.0
          %568 = vmatpush1.msra.mxu0 0.0
          %569 = vmatprep.subr.mxu0 0.0
          %570 = vmatpush1.msra.mxu0 0.0
          %571 = vmatprep.subr.mxu0 0.0
          %572 = vmatpush1.msra.mxu0 0.0
          %573 = vmatprep.subr.mxu0 0.0
          %574 = vmatpush1.msra.mxu0 0.0
          %575 = vmatprep.subr.mxu0 0.0
          %576 = vmatpush1.msra.mxu0 0.0
          %577 = vmatprep.subr.mxu0 0.0
          %578 = vmatpush1.msra.mxu0 0.0
          %579 = vmatprep.subr.mxu0 0.0
          %580 = vmatpush1.msra.mxu0 0.0
          %581 = vmatprep.subr.mxu0 0.0
          %582 = vmatpush1.msra.mxu0 0.0
          %583 = vmatprep.subr.mxu0 0.0
          %584 = vmatpush1.msra.mxu0 0.0
          %585 = vmatprep.subr.mxu0 0.0
          %586 = vmatpush1.msra.mxu0 0.0
          %587 = vmatprep.subr.mxu0 0.0
          %588 = vmatpush1.msra.mxu0 0.0
          %589 = vmatprep.subr.mxu0 0.0
          %590 = vmatpush1.msra.mxu0 0.0
          %591 = vmatprep.subr.mxu0 0.0
          %592 = vmatpush1.msra.mxu0 0.0
          %593 = vmatprep.subr.mxu0 0.0
          %594 = vmatpush1.msra.mxu0 0.0
          %595 = vmatprep.subr.mxu0 0.0
          %596 = vmatpush1.msra.mxu0 0.0
          %597 = vmatprep.subr.mxu0 0.0
          %598 = vmatpush1.msra.mxu0 0.0
          %599 = vmatprep.subr.mxu0 0.0
          %600 = vmatpush1.msra.mxu0 0.0
          %601 = vmatprep.subr.mxu0 0.0
          %602 = vmatpush1.msra.mxu0 0.0
          %603 = vmatprep.subr.mxu0 0.0
          %604 = vmatpush1.msra.mxu0 0.0
          %605 = vmatprep.mubr.f32.mxu0 0.0
          %606 = vmatmul.mubr.f32.gmra.mrb[0].mxu0 %v535
          %v607 = vpop.f32.mrb[0].mxu0
          %v608 = vadd.f32 0.0, %v607
          %v609 = vpop.f32.mrb[0].mxu0
          %610 = vdwg.mxu0
          %611 = vmatprep.subr.mxu0 0.0
          %612 = vmatpush1.msra.mxu0 %v451
          %613 = vmatprep.subr.mxu0 0.0
          %614 = vmatpush1.msra.mxu0 %v452
          %615 = vmatprep.subr.mxu0 0.0
          %616 = vmatpush1.msra.mxu0 %v453
          %617 = vmatprep.subr.mxu0 0.0
          %618 = vmatpush1.msra.mxu0 %v454
          %619 = vmatprep.subr.mxu0 0.0
          %620 = vmatpush1.msra.mxu0 0.0
          %621 = vmatprep.subr.mxu0 0.0
          %622 = vmatpush1.msra.mxu0 0.0
          %623 = vmatprep.subr.mxu0 0.0
          %624 = vmatpush1.msra.mxu0 0.0
          %625 = vmatprep.subr.mxu0 0.0
          %626 = vmatpush1.msra.mxu0 0.0
          %627 = vmatprep.subr.mxu0 0.0
          %628 = vmatpush1.msra.mxu0 0.0
          %629 = vmatprep.subr.mxu0 0.0
          %630 = vmatpush1.msra.mxu0 0.0
          %631 = vmatprep.subr.mxu0 0.0
          %632 = vmatpush1.msra.mxu0 0.0
          %633 = vmatprep.subr.mxu0 0.0
          %634 = vmatpush1.msra.mxu0 0.0
          %635 = vmatprep.subr.mxu0 0.0
          %636 = vmatpush1.msra.mxu0 0.0
          %637 = vmatprep.subr.mxu0 0.0
          %638 = vmatpush1.msra.mxu0 0.0
          %639 = vmatprep.subr.mxu0 0.0
          %640 = vmatpush1.msra.mxu0 0.0
          %641 = vmatprep.subr.mxu0 0.0
          %642 = vmatpush1.msra.mxu0 0.0
          %643 = vmatprep.subr.mxu0 0.0
          %644 = vmatpush1.msra.mxu0 0.0
          %645 = vmatprep.subr.mxu0 0.0
          %646 = vmatpush1.msra.mxu0 0.0
          %647 = vmatprep.subr.mxu0 0.0
          %648 = vmatpush1.msra.mxu0 0.0
          %649 = vmatprep.subr.mxu0 0.0
          %650 = vmatpush1.msra.mxu0 0.0
          %651 = vmatprep.subr.mxu0 0.0
          %652 = vmatpush1.msra.mxu0 0.0
          %653 = vmatprep.subr.mxu0 0.0
          %654 = vmatpush1.msra.mxu0 0.0
          %655 = vmatprep.subr.mxu0 0.0
          %656 = vmatpush1.msra.mxu0 0.0
          %657 = vmatprep.subr.mxu0 0.0
          %658 = vmatpush1.msra.mxu0 0.0
          %659 = vmatprep.subr.mxu0 0.0
          %660 = vmatpush1.msra.mxu0 0.0
          %661 = vmatprep.subr.mxu0 0.0
          %662 = vmatpush1.msra.mxu0 0.0
          %663 = vmatprep.subr.mxu0 0.0
          %664 = vmatpush1.msra.mxu0 0.0
          %665 = vmatprep.subr.mxu0 0.0
          %666 = vmatpush1.msra.mxu0 0.0
          %667 = vmatprep.subr.mxu0 0.0
          %668 = vmatpush1.msra.mxu0 0.0
          %669 = vmatprep.subr.mxu0 0.0
          %670 = vmatpush1.msra.mxu0 0.0
          %671 = vmatprep.subr.mxu0 0.0
          %672 = vmatpush1.msra.mxu0 0.0
          %673 = vmatprep.subr.mxu0 0.0
          %674 = vmatpush1.msra.mxu0 0.0
          %675 = vmatprep.mubr.f32.mxu0 0.0
          %676 = vmatmul.mubr.f32.gmra.mrb[0].mxu0 %v460
          %v677 = vpop.f32.mrb[0].mxu0
          %v678 = vadd.f32 %v608, %v677
          %v679 = vpop.f32.mrb[0].mxu0
          %680 = vdwg.mxu0
          %v681 = vld [vmem:[%s3] sm:$0x1]
          %v683 = vlaneseq
          %v684 = vshrl.u32 %v683, 7
          %v685 = vsub.s32 0, %v684
          %v686 = vrot.slane %v681, %v685
          %v688 = vadd.f32 %v678, %v686
          %689 = vst.msk [vmem:[#allocation9] sm:$0x3] %vm422, %v688
          %vm690 = vcmask 257026
          %691 = vst.msk [vmem:[#allocation10 - $0x2] sm:$0xc] %vm690, %v688
        $region98: #{tpu_custom_call.1} parent=77 // pred_fallthru
          _
        // Predicated region
        $region99: #{tpu_custom_call.1} parent=77 // pred_check
          %p692 = pneg %p195
        $region100: #{tpu_custom_call.1} parent=77 // pred_check_branch
          %694 = sbr.rel (%p692) target = $region102
        $region101: #{tpu_custom_call.1} parent=77 // pred_region
          %s696 = ssub.s32 32, 32
          %697 = vsyncadd [#allocation6], %s696
          %s698 = smul.addr %s29, 32
          %s699 = scalar_lea.hbm %s6, %s698
          %s701 = sshll.u32 [#allocation9], 4
          %s702 = int_to_ptr.vmem [resolvable:$true] %s701
          %704 = dma.vmem_to_hbm [thread:$0]  %s702, 32, %s699, [#allocation6]
        $region102: #{tpu_custom_call.1} parent=77 // pred_fallthru
          _
        // Predicated region
        $region103: #{tpu_custom_call.1} parent=77 // pred_check
          %p705 = pneg %p221
        $region104: #{tpu_custom_call.1} parent=77 // pred_check_branch
          %707 = sbr.rel (%p705) target = $region106
        $region105: #{tpu_custom_call.1} parent=77 // pred_region
          %s709 = ssub.s32 32, 32
          %710 = vsyncadd [#allocation11], %s709
          %s711 = smul.addr %s29, 32
          %s712 = scalar_lea.hbm %s7, %s711
          %s714 = sshll.u32 [#allocation10], 4
          %s715 = int_to_ptr.vmem [resolvable:$true] %s714
          %717 = dma.vmem_to_hbm [thread:$0]  %s715, 32, %s712, [#allocation11]
        $region106: #{tpu_custom_call.1} parent=77 // pred_fallthru
          _
        // Predicated region
        $region107: #{tpu_custom_call.1} parent=77 // pred_check
          %p718 = pneg %p195
        $region108: #{tpu_custom_call.1} parent=77 // pred_check_branch
          %720 = sbr.rel (%p718) target = $region110
        $region109: #{tpu_custom_call.1} parent=77 // pred_region
          %721 = dma.done [#allocation6], 32
        $region110: #{tpu_custom_call.1} parent=77 // pred_fallthru
          _
        // Predicated region
        $region111: #{tpu_custom_call.1} parent=77 // pred_check
          %p722 = pneg %p221
        $region112: #{tpu_custom_call.1} parent=77 // pred_check_branch
          %724 = sbr.rel (%p722) target = $region114
        $region113: #{tpu_custom_call.1} parent=77 // pred_region
          %725 = dma.done [#allocation11], 32
        $region114: #{tpu_custom_call.1} parent=77 // pred_fallthru
          _
      $region78: #{tpu_custom_call.1} parent=5 // pred_fallthru
        _
      %p726 = scmp.le.s32.totalorder 2, %s20
      // Predicated region
      $region115: #{tpu_custom_call.1} parent=5 // pred_check
        %p727 = pneg %p726
      $region116: #{tpu_custom_call.1} parent=5 // pred_check_branch
        %729 = sbr.rel (%p727) target = $region118
      $region117: #{tpu_custom_call.1} parent=5 // pred_region
        %s730 = ssub.s32 %s20, 2
      $region118: #{tpu_custom_call.1} parent=5 // pred_fallthru
        _
    $region6: #{tpu_custom_call.1} parent=1 // loop_footer
      %s24 = sadd.s32 1, %s20
    $region7: #{tpu_custom_call.1} parent=1 // loop_footer_branch
      %19 = sbr.rel target = $region3
    $region8: #{tpu_custom_call.1} parent=1 // loop_exit
      _
    %731 = vsyncpa [#allocation5], 1
    %s732 = scalar_lea.sflag [#allocation5], 1
    %733 = vsyncpa %s732, 1
    %734 = vsyncpa [#allocation8], 1
    %735 = vsyncpa [#allocation6], 1
    %s736 = scalar_lea.sflag [#allocation6], 1
    %737 = vsyncpa %s736, 1
    %738 = vsyncpa [#allocation11], 1

</llo_original>
